<compile_context>
chip_gen: v5e
topology: v5e:2x2
jax: 0.10.0
libtpu: 0.0.40
codegen_flags: <defaults>
</compile_context>

<pallas_src>
import jax
import jax.numpy as jnp
from jax.experimental import pallas as pl
from jax.experimental.pallas import tpu as pltpu


def _conv1x1_kernel(x_ref, w_ref, o_ref):
    # x_ref: (1, Cin, P) f32   w_ref: (Cout_blk, Cin) f32   o_ref: (1, Cout_blk, P) f32
    o_ref[0] = jnp.dot(
        w_ref[...], x_ref[0], preferred_element_type=jnp.float32
    ).astype(o_ref.dtype)


def _conv1x1_call(x, w, *, num_cout_blocks, core_split):
    """x: (N, Cin, P) f32, w: (Cout, Cin) f32 -> (N, Cout, P) f32."""
    N, Cin, P = x.shape
    Cout = w.shape[0]
    assert Cout % num_cout_blocks == 0
    cb = Cout // num_cout_blocks
    assert cb % 8 == 0, "Cout block must be sublane-aligned"

    flops = 2 * N * P * Cin * Cout
    bytes_accessed = (x.size + w.size + N * Cout * P) * 4
    cost = pl.CostEstimate(
        flops=flops, transcendentals=0, bytes_accessed=bytes_accessed
    )
    out_shape = jax.ShapeDtypeStruct((N, Cout, P), jnp.float32)

    if num_cout_blocks == 1:
        # Single grid step per batch element: full weight + full activation slab.
        return pl.pallas_call(
            _conv1x1_kernel,
            out_shape=out_shape,
            grid=(N,),
            in_specs=[
                pl.BlockSpec((1, Cin, P), lambda n: (n, 0, 0)),
                pl.BlockSpec((Cout, Cin), lambda n: (0, 0)),
            ],
            out_specs=pl.BlockSpec((1, Cout, P), lambda n: (n, 0, 0)),
            compiler_params=pltpu.CompilerParams(
                dimension_semantics=("parallel",),
            ),
            cost_estimate=cost,
        )(x, w)

    # 2-way Cout split; on v7x the leading axis is core-parallel so each
    # TensorCore handles half the output writeback.
    lead_sem = pltpu.CORE_PARALLEL if core_split else pltpu.PARALLEL
    return pl.pallas_call(
        _conv1x1_kernel,
        out_shape=out_shape,
        grid=(num_cout_blocks, N),
        in_specs=[
            # Same activation slab for every Cout block (stays resident).
            pl.BlockSpec((1, Cin, P), lambda j, n: (n, 0, 0)),
            pl.BlockSpec((cb, Cin), lambda j, n: (j, 0)),
        ],
        out_specs=pl.BlockSpec((1, cb, P), lambda j, n: (n, j, 0)),
        compiler_params=pltpu.CompilerParams(
            dimension_semantics=(lead_sem, pltpu.ARBITRARY),
        ),
        cost_estimate=cost,
    )(x, w)


def _is_v7x():
    try:
        kind = jax.devices()[0].device_kind.lower()
    except Exception:
        return False
    return ("v7" in kind) or ("tpu7" in kind)


def conv2d_1x1(x_nchw, weight_oi):
    """1x1 conv, stride 1, no bias, computed natively in NCHW.

    x_nchw:    (N, Cin, H, W)  float32
    weight_oi: (Cout, Cin)     float32  (PyTorch Conv2d weight squeezed)
    returns:   (N, Cout, H, W) float32
    """
    N, Cin, H, W = x_nchw.shape
    Cout = weight_oi.shape[0]
    P = H * W

    # Free reshape: NCHW is contiguous in (N, Cin, H*W). No transpose, no cast.
    x = x_nchw.reshape(N, Cin, P)

    if _is_v7x() and Cout % 2 == 0 and (Cout // 2) % 8 == 0:
        try:
            out = _conv1x1_call(x, weight_oi, num_cout_blocks=2, core_split=True)
            out = jax.block_until_ready(out)
            return out.reshape(N, Cout, H, W)
        except Exception:
            pass  # fall back to the portable single-step path below

    out = _conv1x1_call(x, weight_oi, num_cout_blocks=1, core_split=False)
    # (N, Cout, P) -> (N, Cout, H, W): pure reshape, no transpose.
    return out.reshape(N, Cout, H, W)


if __name__ == "__main__":
    key = jax.random.PRNGKey(0)
    kx, kw = jax.random.split(key)

    # Shapes from the module's forward: x228 = [1, 72, 28, 28], Conv2d(72 -> 432, 1x1).
    N, Cin, H, W, Cout = 1, 72, 28, 28, 432
    x = jax.random.normal(kx, (N, Cin, H, W), dtype=jnp.float32)
    # PyTorch Conv2d weight layout (Cout, Cin, 1, 1), kaiming-ish scale.
    weight = jax.random.normal(kw, (Cout, Cin, 1, 1), dtype=jnp.float32) * (1.0 / Cin) ** 0.5

    out = conv2d_1x1(x, weight[:, :, 0, 0])
    out = jax.block_until_ready(out)

    # f32 reference (HIGHEST so the XLA-side einsum does not itself drop precision).
    ref = jnp.einsum(
        "nchw,oc->nohw", x, weight[:, :, 0, 0],
        precision=jax.lax.Precision.HIGHEST,
    )

    assert out.shape == (N, Cout, H, W)
    # Tolerance covers the MXU's multi-pass bf16 decomposition of the f32 matmul.
    assert jnp.allclose(out, ref, atol=2e-2, rtol=2e-2), float(
        jnp.max(jnp.abs(out - ref))
    )

    print("KERNEL_OK")
</pallas_src>

<mosaic_0001>
module attributes {stable_mosaic.version = 11 : i64} {
  func.func @_conv1x1_kernel(%arg0: i32, %arg1: memref<1x72x784xf32, #tpu.memory_space<vmem>>, %arg2: memref<432x72xf32, #tpu.memory_space<vmem>>, %arg3: memref<1x432x784xf32, #tpu.memory_space<vmem>>) attributes {dimension_semantics = [#tpu.dimension_semantics<parallel>], iteration_bounds = array<i64: 1>, scalar_prefetch = 0 : i64, scratch_operands = 0 : i64, tpu.core_type = #tpu.core_type<tc>, window_params = [{transform_indices = @transform_0, window_bounds = array<i64: 1, 72, 784>}, {pipeline_mode = #tpu.pipeline_mode<synchronous>, transform_indices = @transform_1, window_bounds = array<i64: 432, 72>}, {transform_indices = @transform_2, window_bounds = array<i64: 1, 432, 784>}]} {
    %c0 = arith.constant 0 : index
    %c0_0 = arith.constant 0 : index
    %0 = vector.load %arg2[%c0, %c0_0] : memref<432x72xf32, #tpu.memory_space<vmem>>, vector<432x72xf32>
    %c0_1 = arith.constant 0 : index
    %c0_2 = arith.constant 0 : index
    %c0_3 = arith.constant 0 : index
    %1 = vector.load %arg1[%c0_1, %c0_2, %c0_3] : memref<1x72x784xf32, #tpu.memory_space<vmem>>, vector<1x72x784xf32>
    %2 = vector.shape_cast %1 : vector<1x72x784xf32> to vector<72x784xf32>
    %cst = arith.constant dense<0.000000e+00> : vector<432x784xf32>
    %3 = tpu.matmul %0, %2, %cst {dimension_numbers = #tpu.dot_dimension_numbers<[1], [0], [0], [1], [0, 0, 1, 1], [], []>} : vector<432x72xf32>, vector<72x784xf32>, vector<432x784xf32> -> vector<432x784xf32>
    %c0_4 = arith.constant 0 : index
    %c0_5 = arith.constant 0 : index
    %c0_6 = arith.constant 0 : index
    %4 = vector.load %arg3[%c0_4, %c0_5, %c0_6] : memref<1x432x784xf32, #tpu.memory_space<vmem>>, vector<1x432x784xf32>
    %5 = vector.shape_cast %4 : vector<1x432x784xf32> to vector<432x784xf32>
    %6 = vector.shape_cast %3 : vector<432x784xf32> to vector<1x432x784xf32>
    tpu.vector_store %arg3[%c0_4, %c0_5, %c0_6], %6 {strides = array<i32>} : memref<1x432x784xf32, #tpu.memory_space<vmem>>, vector<1x432x784xf32>,
    return
  }
  func.func @transform_0(%arg0: i32) -> (i32, i32, i32) {
    %c0_i32 = arith.constant 0 : i32
    %c0_i32_0 = arith.constant 0 : i32
    %c0_i32_1 = arith.constant 0 : i32
    return %arg0, %c0_i32, %c0_i32_0 : i32, i32, i32
  }
  func.func @transform_1(%arg0: i32) -> (i32, i32) {
    %c0_i32 = arith.constant 0 : i32
    %c0_i32_0 = arith.constant 0 : i32
    %c0_i32_1 = arith.constant 0 : i32
    return %c0_i32, %c0_i32_0 : i32, i32
  }
  func.func @transform_2(%arg0: i32) -> (i32, i32, i32) {
    %c0_i32 = arith.constant 0 : i32
    %c0_i32_0 = arith.constant 0 : i32
    %c0_i32_1 = arith.constant 0 : i32
    return %arg0, %c0_i32, %c0_i32_0 : i32, i32, i32
  }
}

</mosaic_0001>

<llo_original>
// kernel: tpu_custom_call.1
$region0: #{tpu_custom_call.1}
  #allocation0 [shape = 'u32[]', space=smem, size = 0x4, offset = 0x4, fixed_abs, tag = 'smem constant byte address 0x4 - core index']
  #allocation1 [shape = 'u32[72,128]{1,0:T(1,128)}', space=vmem, size = 0x9000, scoped, tag = 'internal scratch']
  %s0 = inlined_call_operand.hbm [shape: f32[1,72,784], index: 0, kind: input, shape index: {}]
  %s1 = inlined_call_operand.vmem [shape: f32[432,72], index: 1, kind: input, shape index: {}]
  %s2 = inlined_call_operand.hbm [shape: f32[1,432,784], index: 2, kind: output, shape index: {}]
  %s3 = sld [smem:[#allocation0]]
  $region22: #{tpu_custom_call.1} parent=0
    _
  %s5 = ssub.s32 1, %s3
  %s6 = scalar_select 0, %s5, %s3
  $region1: #{tpu_custom_call.1} parent=0
    #allocation2 [shape = 'u8[258048]{0}', space=vmem, size = 0x3f000, scoped, tag = 'input window, operand 0, single buffered']
    #allocation3 [shape = 's32[1]{0}', space=sflag, size = 0x4, scoped, tag = 'scoped memory for tpu_custom_call.1']
    #allocation4 [shape = 's32[1]{0}', space=sflag, size = 0x4, scoped, tag = 'scoped memory for tpu_custom_call.1']
    #allocation5 [shape = 'u8[1548288]{0}', space=vmem, size = 0x17a000, scoped, tag = 'output window, operand 0, single buffered']
    %7 = vsyncpa [#allocation3], 0
    %8 = vsyncpa [#allocation4], 0
    // Predicated region
    $region2: #{tpu_custom_call.1} parent=1 // pred_check
      _
    $region3: #{tpu_custom_call.1} parent=1 // pred_check_branch
      %10 = sbr.rel (0) target = $region5
    $region4: #{tpu_custom_call.1} parent=1 // pred_region
      %12 = vsyncadd [#allocation3], 0
      %s13 = sshll.u32 %s0, 4
      %s14 = int_to_ptr.hbm [resolvable:$true] %s13
      %s15 = sshll.u32 [#allocation2], 4
      %s16 = int_to_ptr.vmem [resolvable:$true] %s15
      %21 = dma.hbm_to_vmem [thread:$0]  %s14, 8064, %s16, [#allocation3], 896, 896, 56
    $region5: #{tpu_custom_call.1} parent=1 // pred_fallthru
      _
    // Predicated region
    $region6: #{tpu_custom_call.1} parent=1 // pred_check
      _
    $region7: #{tpu_custom_call.1} parent=1 // pred_check_branch
      %23 = sbr.rel (0) target = $region9
    $region8: #{tpu_custom_call.1} parent=1 // pred_region
      _
    $region9: #{tpu_custom_call.1} parent=1 // pred_fallthru
      _
    // Predicated region
    $region10: #{tpu_custom_call.1} parent=1 // pred_check
      _
    $region11: #{tpu_custom_call.1} parent=1 // pred_check_branch
      %25 = sbr.rel (0) target = $region13
    $region12: #{tpu_custom_call.1} parent=1 // pred_region
      %27 = dma.done [#allocation3], 8064
    $region13: #{tpu_custom_call.1} parent=1 // pred_fallthru
      _
    %v28 = vld [vmem:[%s1] sm:$0xff]
    %v29 = vld [vmem:[%s1 + $0x8] sm:$0xff]
    %v30 = vld [vmem:[%s1 + $0x10] sm:$0xff]
    %v31 = vld [vmem:[%s1 + $0x18] sm:$0xff]
    %v32 = vld [vmem:[%s1 + $0x20] sm:$0xff]
    %v33 = vld [vmem:[%s1 + $0x28] sm:$0xff]
    %v34 = vld [vmem:[%s1 + $0x30] sm:$0xff]
    %v35 = vld [vmem:[%s1 + $0x38] sm:$0xff]
    %v36 = vld [vmem:[%s1 + $0x40] sm:$0xff]
    %v37 = vld [vmem:[%s1 + $0x48] sm:$0xff]
    %v38 = vld [vmem:[%s1 + $0x50] sm:$0xff]
    %v39 = vld [vmem:[%s1 + $0x58] sm:$0xff]
    %v40 = vld [vmem:[%s1 + $0x60] sm:$0xff]
    %v41 = vld [vmem:[%s1 + $0x68] sm:$0xff]
    %v42 = vld [vmem:[%s1 + $0x70] sm:$0xff]
    %v43 = vld [vmem:[%s1 + $0x78] sm:$0xff]
    %v44 = vld [vmem:[%s1 + $0x80] sm:$0xff]
    %v45 = vld [vmem:[%s1 + $0x88] sm:$0xff]
    %v46 = vld [vmem:[%s1 + $0x90] sm:$0xff]
    %v47 = vld [vmem:[%s1 + $0x98] sm:$0xff]
    %v48 = vld [vmem:[%s1 + $0xa0] sm:$0xff]
    %v49 = vld [vmem:[%s1 + $0xa8] sm:$0xff]
    %v50 = vld [vmem:[%s1 + $0xb0] sm:$0xff]
    %v51 = vld [vmem:[%s1 + $0xb8] sm:$0xff]
    %v52 = vld [vmem:[%s1 + $0xc0] sm:$0xff]
    %v53 = vld [vmem:[%s1 + $0xc8] sm:$0xff]
    %v54 = vld [vmem:[%s1 + $0xd0] sm:$0xff]
    %v55 = vld [vmem:[%s1 + $0xd8] sm:$0xff]
    %v56 = vld [vmem:[%s1 + $0xe0] sm:$0xff]
    %v57 = vld [vmem:[%s1 + $0xe8] sm:$0xff]
    %v58 = vld [vmem:[%s1 + $0xf0] sm:$0xff]
    %v59 = vld [vmem:[%s1 + $0xf8] sm:$0xff]
    %v60 = vld [vmem:[%s1 + $0x100] sm:$0xff]
    %v61 = vld [vmem:[%s1 + $0x108] sm:$0xff]
    %v62 = vld [vmem:[%s1 + $0x110] sm:$0xff]
    %v63 = vld [vmem:[%s1 + $0x118] sm:$0xff]
    %v64 = vld [vmem:[%s1 + $0x120] sm:$0xff]
    %v65 = vld [vmem:[%s1 + $0x128] sm:$0xff]
    %v66 = vld [vmem:[%s1 + $0x130] sm:$0xff]
    %v67 = vld [vmem:[%s1 + $0x138] sm:$0xff]
    %v68 = vld [vmem:[%s1 + $0x140] sm:$0xff]
    %v69 = vld [vmem:[%s1 + $0x148] sm:$0xff]
    %v70 = vld [vmem:[%s1 + $0x150] sm:$0xff]
    %v71 = vld [vmem:[%s1 + $0x158] sm:$0xff]
    %v72 = vld [vmem:[%s1 + $0x160] sm:$0xff]
    %v73 = vld [vmem:[%s1 + $0x168] sm:$0xff]
    %v74 = vld [vmem:[%s1 + $0x170] sm:$0xff]
    %v75 = vld [vmem:[%s1 + $0x178] sm:$0xff]
    %v76 = vld [vmem:[%s1 + $0x180] sm:$0xff]
    %v77 = vld [vmem:[%s1 + $0x188] sm:$0xff]
    %v78 = vld [vmem:[%s1 + $0x190] sm:$0xff]
    %v79 = vld [vmem:[%s1 + $0x198] sm:$0xff]
    %v80 = vld [vmem:[%s1 + $0x1a0] sm:$0xff]
    %v81 = vld [vmem:[%s1 + $0x1a8] sm:$0xff]
    %v82 = vld [vmem:[#allocation2] sm:$0xff]
    %v83 = vld [vmem:[#allocation2 + $0x8] sm:$0xff]
    %v84 = vld [vmem:[#allocation2 + $0x10] sm:$0xff]
    %v85 = vld [vmem:[#allocation2 + $0x18] sm:$0xff]
    %v86 = vld [vmem:[#allocation2 + $0x20] sm:$0xff]
    %v87 = vld [vmem:[#allocation2 + $0x28] sm:$0xff]
    %v88 = vld [vmem:[#allocation2 + $0x30] sm:$0xff]
    %v89 = vld [vmem:[#allocation2 + $0x38] sm:$0xff]
    %v90 = vld [vmem:[#allocation2 + $0x40] sm:$0xff]
    %v91 = vld [vmem:[#allocation2 + $0x48] sm:$0xff]
    %v92 = vld [vmem:[#allocation2 + $0x50] sm:$0xff]
    %v93 = vld [vmem:[#allocation2 + $0x58] sm:$0xff]
    %v94 = vld [vmem:[#allocation2 + $0x60] sm:$0xff]
    %v95 = vld [vmem:[#allocation2 + $0x68] sm:$0xff]
    %v96 = vld [vmem:[#allocation2 + $0x70] sm:$0xff]
    %v97 = vld [vmem:[#allocation2 + $0x78] sm:$0xff]
    %v98 = vld [vmem:[#allocation2 + $0x80] sm:$0xff]
    %v99 = vld [vmem:[#allocation2 + $0x88] sm:$0xff]
    %v100 = vld [vmem:[#allocation2 + $0x90] sm:$0xff]
    %v101 = vld [vmem:[#allocation2 + $0x98] sm:$0xff]
    %v102 = vld [vmem:[#allocation2 + $0xa0] sm:$0xff]
    %v103 = vld [vmem:[#allocation2 + $0xa8] sm:$0xff]
    %v104 = vld [vmem:[#allocation2 + $0xb0] sm:$0xff]
    %v105 = vld [vmem:[#allocation2 + $0xb8] sm:$0xff]
    %v106 = vld [vmem:[#allocation2 + $0xc0] sm:$0xff]
    %v107 = vld [vmem:[#allocation2 + $0xc8] sm:$0xff]
    %v108 = vld [vmem:[#allocation2 + $0xd0] sm:$0xff]
    %v109 = vld [vmem:[#allocation2 + $0xd8] sm:$0xff]
    %v110 = vld [vmem:[#allocation2 + $0xe0] sm:$0xff]
    %v111 = vld [vmem:[#allocation2 + $0xe8] sm:$0xff]
    %v112 = vld [vmem:[#allocation2 + $0xf0] sm:$0xff]
    %v113 = vld [vmem:[#allocation2 + $0xf8] sm:$0xff]
    %v114 = vld [vmem:[#allocation2 + $0x100] sm:$0xff]
    %v115 = vld [vmem:[#allocation2 + $0x108] sm:$0xff]
    %v116 = vld [vmem:[#allocation2 + $0x110] sm:$0xff]
    %v117 = vld [vmem:[#allocation2 + $0x118] sm:$0xff]
    %v118 = vld [vmem:[#allocation2 + $0x120] sm:$0xff]
    %v119 = vld [vmem:[#allocation2 + $0x128] sm:$0xff]
    %v120 = vld [vmem:[#allocation2 + $0x130] sm:$0xff]
    %v121 = vld [vmem:[#allocation2 + $0x138] sm:$0xff]
    %v122 = vld [vmem:[#allocation2 + $0x140] sm:$0xff]
    %v123 = vld [vmem:[#allocation2 + $0x148] sm:$0xff]
    %v124 = vld [vmem:[#allocation2 + $0x150] sm:$0xff]
    %v125 = vld [vmem:[#allocation2 + $0x158] sm:$0xff]
    %v126 = vld [vmem:[#allocation2 + $0x160] sm:$0xff]
    %v127 = vld [vmem:[#allocation2 + $0x168] sm:$0xff]
    %v128 = vld [vmem:[#allocation2 + $0x170] sm:$0xff]
    %v129 = vld [vmem:[#allocation2 + $0x178] sm:$0xff]
    %v130 = vld [vmem:[#allocation2 + $0x180] sm:$0xff]
    %v131 = vld [vmem:[#allocation2 + $0x188] sm:$0xff]
    %v132 = vld [vmem:[#allocation2 + $0x190] sm:$0xff]
    %v133 = vld [vmem:[#allocation2 + $0x198] sm:$0xff]
    %v134 = vld [vmem:[#allocation2 + $0x1a0] sm:$0xff]
    %v135 = vld [vmem:[#allocation2 + $0x1a8] sm:$0xff]
    %v136 = vld [vmem:[#allocation2 + $0x1b0] sm:$0xff]
    %v137 = vld [vmem:[#allocation2 + $0x1b8] sm:$0xff]
    %v138 = vld [vmem:[#allocation2 + $0x1c0] sm:$0xff]
    %v139 = vld [vmem:[#allocation2 + $0x1c8] sm:$0xff]
    %v140 = vld [vmem:[#allocation2 + $0x1d0] sm:$0xff]
    %v141 = vld [vmem:[#allocation2 + $0x1d8] sm:$0xff]
    %v142 = vld [vmem:[#allocation2 + $0x1e0] sm:$0xff]
    %v143 = vld [vmem:[#allocation2 + $0x1e8] sm:$0xff]
    %v144 = vld [vmem:[#allocation2 + $0x1f0] sm:$0xff]
    %vm145 = vcmask 588800
    %v147 = vsel %vm145, %v28, 0
    %v150 = vsel %vm145, %v29, 0
    %v153 = vsel %vm145, %v30, 0
    %v156 = vsel %vm145, %v31, 0
    %v159 = vsel %vm145, %v32, 0
    %v162 = vsel %vm145, %v33, 0
    %v165 = vsel %vm145, %v34, 0
    %v168 = vsel %vm145, %v35, 0
    %v171 = vsel %vm145, %v36, 0
    %v174 = vsel %vm145, %v37, 0
    %v177 = vsel %vm145, %v38, 0
    %v180 = vsel %vm145, %v39, 0
    %v183 = vsel %vm145, %v40, 0
    %v186 = vsel %vm145, %v41, 0
    %v189 = vsel %vm145, %v42, 0
    %v192 = vsel %vm145, %v43, 0
    %v195 = vsel %vm145, %v44, 0
    %v198 = vsel %vm145, %v45, 0
    %v201 = vsel %vm145, %v46, 0
    %v204 = vsel %vm145, %v47, 0
    %v207 = vsel %vm145, %v48, 0
    %v210 = vsel %vm145, %v49, 0
    %v213 = vsel %vm145, %v50, 0
    %v216 = vsel %vm145, %v51, 0
    %v219 = vsel %vm145, %v52, 0
    %v222 = vsel %vm145, %v53, 0
    %v225 = vsel %vm145, %v54, 0
    %v228 = vsel %vm145, %v55, 0
    %v231 = vsel %vm145, %v56, 0
    %v234 = vsel %vm145, %v57, 0
    %v237 = vsel %vm145, %v58, 0
    %v240 = vsel %vm145, %v59, 0
    %v243 = vsel %vm145, %v60, 0
    %v246 = vsel %vm145, %v61, 0
    %v249 = vsel %vm145, %v62, 0
    %v252 = vsel %vm145, %v63, 0
    %v255 = vsel %vm145, %v64, 0
    %v258 = vsel %vm145, %v65, 0
    %v261 = vsel %vm145, %v66, 0
    %v264 = vsel %vm145, %v67, 0
    %v267 = vsel %vm145, %v68, 0
    %v270 = vsel %vm145, %v69, 0
    %v273 = vsel %vm145, %v70, 0
    %v276 = vsel %vm145, %v71, 0
    %v279 = vsel %vm145, %v72, 0
    %v282 = vsel %vm145, %v73, 0
    %v285 = vsel %vm145, %v74, 0
    %v288 = vsel %vm145, %v75, 0
    %v291 = vsel %vm145, %v76, 0
    %v294 = vsel %vm145, %v77, 0
    %v297 = vsel %vm145, %v78, 0
    %v300 = vsel %vm145, %v79, 0
    %v303 = vsel %vm145, %v80, 0
    %v306 = vsel %vm145, %v81, 0
    %308 = vmatpush.msra.mxu0 0.0
    %309 = vmatpush.msra.mxu0 0.0
    %310 = vmatpush.msra.mxu0 0.0
    %311 = vmatpush.msra.mxu0 0.0
    %312 = vmatpush.msra.mxu0 0.0
    %313 = vmatpush.msra.mxu0 0.0
    %314 = vmatpush.msra.mxu0 0.0
    %315 = vmatpush.msra.mxu0 %v138
    %316 = vmatpush.msra.mxu0 %v131
    %317 = vmatpush.msra.mxu0 %v124
    %318 = vmatpush.msra.mxu0 %v117
    %319 = vmatpush.msra.mxu0 %v110
    %320 = vmatpush.msra.mxu0 %v103
    %321 = vmatpush.msra.mxu0 %v96
    %322 = vmatpush.msra.mxu0 %v89
    %323 = vmatpush.msra.mxu0 %v82
    %324 = vmatmul.f32.gmra.mxu0 %v147
    %v325 = vpop.f32.mrf.mxu0
    %v326 = vadd.f32 0.0, %v325
    %327 = vmatmul.f32.gmra.mxu0 %v150
    %v328 = vpop.f32.mrf.mxu0
    %v329 = vadd.f32 0.0, %v328
    %330 = vmatmul.f32.gmra.mxu0 %v153
    %v331 = vpop.f32.mrf.mxu0
    %v332 = vadd.f32 0.0, %v331
    %333 = vmatmul.f32.gmra.mxu0 %v156
    %v334 = vpop.f32.mrf.mxu0
    %v335 = vadd.f32 0.0, %v334
    %336 = vmatmul.f32.gmra.mxu0 %v159
    %v337 = vpop.f32.mrf.mxu0
    %v338 = vadd.f32 0.0, %v337
    %339 = vmatmul.f32.gmra.mxu0 %v162
    %v340 = vpop.f32.mrf.mxu0
    %v341 = vadd.f32 0.0, %v340
    %342 = vmatmul.f32.gmra.mxu0 %v165
    %v343 = vpop.f32.mrf.mxu0
    %v344 = vadd.f32 0.0, %v343
    %345 = vmatmul.f32.gmra.mxu0 %v168
    %v346 = vpop.f32.mrf.mxu0
    %v347 = vadd.f32 0.0, %v346
    %348 = vmatmul.f32.gmra.mxu0 %v171
    %v349 = vpop.f32.mrf.mxu0
    %v350 = vadd.f32 0.0, %v349
    %351 = vmatmul.f32.gmra.mxu0 %v174
    %v352 = vpop.f32.mrf.mxu0
    %v353 = vadd.f32 0.0, %v352
    %354 = vmatmul.f32.gmra.mxu0 %v177
    %v355 = vpop.f32.mrf.mxu0
    %v356 = vadd.f32 0.0, %v355
    %357 = vmatmul.f32.gmra.mxu0 %v180
    %v358 = vpop.f32.mrf.mxu0
    %v359 = vadd.f32 0.0, %v358
    %360 = vmatmul.f32.gmra.mxu0 %v183
    %v361 = vpop.f32.mrf.mxu0
    %v362 = vadd.f32 0.0, %v361
    %363 = vmatmul.f32.gmra.mxu0 %v186
    %v364 = vpop.f32.mrf.mxu0
    %v365 = vadd.f32 0.0, %v364
    %366 = vmatmul.f32.gmra.mxu0 %v189
    %v367 = vpop.f32.mrf.mxu0
    %v368 = vadd.f32 0.0, %v367
    %369 = vmatmul.f32.gmra.mxu0 %v192
    %v370 = vpop.f32.mrf.mxu0
    %v371 = vadd.f32 0.0, %v370
    %372 = vmatmul.f32.gmra.mxu0 %v195
    %v373 = vpop.f32.mrf.mxu0
    %v374 = vadd.f32 0.0, %v373
    %375 = vmatmul.f32.gmra.mxu0 %v198
    %v376 = vpop.f32.mrf.mxu0
    %v377 = vadd.f32 0.0, %v376
    %378 = vmatmul.f32.gmra.mxu0 %v201
    %v379 = vpop.f32.mrf.mxu0
    %v380 = vadd.f32 0.0, %v379
    %381 = vmatmul.f32.gmra.mxu0 %v204
    %v382 = vpop.f32.mrf.mxu0
    %v383 = vadd.f32 0.0, %v382
    %384 = vmatmul.f32.gmra.mxu0 %v207
    %v385 = vpop.f32.mrf.mxu0
    %v386 = vadd.f32 0.0, %v385
    %387 = vmatmul.f32.gmra.mxu0 %v210
    %v388 = vpop.f32.mrf.mxu0
    %v389 = vadd.f32 0.0, %v388
    %390 = vmatmul.f32.gmra.mxu0 %v213
    %v391 = vpop.f32.mrf.mxu0
    %v392 = vadd.f32 0.0, %v391
    %393 = vmatmul.f32.gmra.mxu0 %v216
    %v394 = vpop.f32.mrf.mxu0
    %v395 = vadd.f32 0.0, %v394
    %396 = vmatmul.f32.gmra.mxu0 %v219
    %v397 = vpop.f32.mrf.mxu0
    %v398 = vadd.f32 0.0, %v397
    %399 = vmatmul.f32.gmra.mxu0 %v222
    %v400 = vpop.f32.mrf.mxu0
    %v401 = vadd.f32 0.0, %v400
    %402 = vmatmul.f32.gmra.mxu0 %v225
    %v403 = vpop.f32.mrf.mxu0
    %v404 = vadd.f32 0.0, %v403
    %405 = vmatmul.f32.gmra.mxu0 %v228
    %v406 = vpop.f32.mrf.mxu0
    %v407 = vadd.f32 0.0, %v406
    %408 = vmatmul.f32.gmra.mxu0 %v231
    %v409 = vpop.f32.mrf.mxu0
    %v410 = vadd.f32 0.0, %v409
    %411 = vmatmul.f32.gmra.mxu0 %v234
    %v412 = vpop.f32.mrf.mxu0
    %v413 = vadd.f32 0.0, %v412
    %414 = vmatmul.f32.gmra.mxu0 %v237
    %v415 = vpop.f32.mrf.mxu0
    %v416 = vadd.f32 0.0, %v415
    %417 = vmatmul.f32.gmra.mxu0 %v240
    %v418 = vpop.f32.mrf.mxu0
    %v419 = vadd.f32 0.0, %v418
    %420 = vmatmul.f32.gmra.mxu0 %v243
    %v421 = vpop.f32.mrf.mxu0
    %v422 = vadd.f32 0.0, %v421
    %423 = vmatmul.f32.gmra.mxu0 %v246
    %v424 = vpop.f32.mrf.mxu0
    %v425 = vadd.f32 0.0, %v424
    %426 = vmatmul.f32.gmra.mxu0 %v249
    %v427 = vpop.f32.mrf.mxu0
    %v428 = vadd.f32 0.0, %v427
    %429 = vmatmul.f32.gmra.mxu0 %v252
    %v430 = vpop.f32.mrf.mxu0
    %v431 = vadd.f32 0.0, %v430
    %432 = vmatmul.f32.gmra.mxu0 %v255
    %v433 = vpop.f32.mrf.mxu0
    %v434 = vadd.f32 0.0, %v433
    %435 = vmatmul.f32.gmra.mxu0 %v258
    %v436 = vpop.f32.mrf.mxu0
    %v437 = vadd.f32 0.0, %v436
    %438 = vmatmul.f32.gmra.mxu0 %v261
    %v439 = vpop.f32.mrf.mxu0
    %v440 = vadd.f32 0.0, %v439
    %441 = vmatmul.f32.gmra.mxu0 %v264
    %v442 = vpop.f32.mrf.mxu0
    %v443 = vadd.f32 0.0, %v442
    %444 = vmatmul.f32.gmra.mxu0 %v267
    %v445 = vpop.f32.mrf.mxu0
    %v446 = vadd.f32 0.0, %v445
    %447 = vmatmul.f32.gmra.mxu0 %v270
    %v448 = vpop.f32.mrf.mxu0
    %v449 = vadd.f32 0.0, %v448
    %450 = vmatmul.f32.gmra.mxu0 %v273
    %v451 = vpop.f32.mrf.mxu0
    %v452 = vadd.f32 0.0, %v451
    %453 = vmatmul.f32.gmra.mxu0 %v276
    %v454 = vpop.f32.mrf.mxu0
    %v455 = vadd.f32 0.0, %v454
    %456 = vmatmul.f32.gmra.mxu0 %v279
    %v457 = vpop.f32.mrf.mxu0
    %v458 = vadd.f32 0.0, %v457
    %459 = vmatmul.f32.gmra.mxu0 %v282
    %v460 = vpop.f32.mrf.mxu0
    %v461 = vadd.f32 0.0, %v460
    %462 = vmatmul.f32.gmra.mxu0 %v285
    %v463 = vpop.f32.mrf.mxu0
    %v464 = vadd.f32 0.0, %v463
    %465 = vmatmul.f32.gmra.mxu0 %v288
    %v466 = vpop.f32.mrf.mxu0
    %v467 = vadd.f32 0.0, %v466
    %468 = vmatmul.f32.gmra.mxu0 %v291
    %v469 = vpop.f32.mrf.mxu0
    %v470 = vadd.f32 0.0, %v469
    %471 = vmatmul.f32.gmra.mxu0 %v294
    %v472 = vpop.f32.mrf.mxu0
    %v473 = vadd.f32 0.0, %v472
    %474 = vmatmul.f32.gmra.mxu0 %v297
    %v475 = vpop.f32.mrf.mxu0
    %v476 = vadd.f32 0.0, %v475
    %477 = vmatmul.f32.gmra.mxu0 %v300
    %v478 = vpop.f32.mrf.mxu0
    %v479 = vadd.f32 0.0, %v478
    %480 = vmatmul.f32.gmra.mxu0 %v303
    %v481 = vpop.f32.mrf.mxu0
    %v482 = vadd.f32 0.0, %v481
    %483 = vmatmul.f32.gmra.mxu0 %v306
    %v484 = vpop.f32.mrf.mxu0
    %v485 = vadd.f32 0.0, %v484
    %486 = vdwg.mxu0
    %487 = vmatpush.msra.mxu0 0.0
    %488 = vmatpush.msra.mxu0 0.0
    %489 = vmatpush.msra.mxu0 0.0
    %490 = vmatpush.msra.mxu0 0.0
    %491 = vmatpush.msra.mxu0 0.0
    %492 = vmatpush.msra.mxu0 0.0
    %493 = vmatpush.msra.mxu0 0.0
    %494 = vmatpush.msra.mxu0 %v139
    %495 = vmatpush.msra.mxu0 %v132
    %496 = vmatpush.msra.mxu0 %v125
    %497 = vmatpush.msra.mxu0 %v118
    %498 = vmatpush.msra.mxu0 %v111
    %499 = vmatpush.msra.mxu0 %v104
    %500 = vmatpush.msra.mxu0 %v97
    %501 = vmatpush.msra.mxu0 %v90
    %502 = vmatpush.msra.mxu0 %v83
    %503 = vmatmul.f32.gmra.mxu0 %v147
    %v504 = vpop.f32.mrf.mxu0
    %v505 = vadd.f32 0.0, %v504
    %506 = vmatmul.f32.gmra.mxu0 %v150
    %v507 = vpop.f32.mrf.mxu0
    %v508 = vadd.f32 0.0, %v507
    %509 = vmatmul.f32.gmra.mxu0 %v153
    %v510 = vpop.f32.mrf.mxu0
    %v511 = vadd.f32 0.0, %v510
    %512 = vmatmul.f32.gmra.mxu0 %v156
    %v513 = vpop.f32.mrf.mxu0
    %v514 = vadd.f32 0.0, %v513
    %515 = vmatmul.f32.gmra.mxu0 %v159
    %v516 = vpop.f32.mrf.mxu0
    %v517 = vadd.f32 0.0, %v516
    %518 = vmatmul.f32.gmra.mxu0 %v162
    %v519 = vpop.f32.mrf.mxu0
    %v520 = vadd.f32 0.0, %v519
    %521 = vmatmul.f32.gmra.mxu0 %v165
    %v522 = vpop.f32.mrf.mxu0
    %v523 = vadd.f32 0.0, %v522
    %524 = vmatmul.f32.gmra.mxu0 %v168
    %v525 = vpop.f32.mrf.mxu0
    %v526 = vadd.f32 0.0, %v525
    %527 = vmatmul.f32.gmra.mxu0 %v171
    %v528 = vpop.f32.mrf.mxu0
    %v529 = vadd.f32 0.0, %v528
    %530 = vmatmul.f32.gmra.mxu0 %v174
    %v531 = vpop.f32.mrf.mxu0
    %v532 = vadd.f32 0.0, %v531
    %533 = vmatmul.f32.gmra.mxu0 %v177
    %v534 = vpop.f32.mrf.mxu0
    %v535 = vadd.f32 0.0, %v534
    %536 = vmatmul.f32.gmra.mxu0 %v180
    %v537 = vpop.f32.mrf.mxu0
    %v538 = vadd.f32 0.0, %v537
    %539 = vmatmul.f32.gmra.mxu0 %v183
    %v540 = vpop.f32.mrf.mxu0
    %v541 = vadd.f32 0.0, %v540
    %542 = vmatmul.f32.gmra.mxu0 %v186
    %v543 = vpop.f32.mrf.mxu0
    %v544 = vadd.f32 0.0, %v543
    %545 = vmatmul.f32.gmra.mxu0 %v189
    %v546 = vpop.f32.mrf.mxu0
    %v547 = vadd.f32 0.0, %v546
    %548 = vmatmul.f32.gmra.mxu0 %v192
    %v549 = vpop.f32.mrf.mxu0
    %v550 = vadd.f32 0.0, %v549
    %551 = vmatmul.f32.gmra.mxu0 %v195
    %v552 = vpop.f32.mrf.mxu0
    %v553 = vadd.f32 0.0, %v552
    %554 = vmatmul.f32.gmra.mxu0 %v198
    %v555 = vpop.f32.mrf.mxu0
    %v556 = vadd.f32 0.0, %v555
    %557 = vmatmul.f32.gmra.mxu0 %v201
    %v558 = vpop.f32.mrf.mxu0
    %v559 = vadd.f32 0.0, %v558
    %560 = vmatmul.f32.gmra.mxu0 %v204
    %v561 = vpop.f32.mrf.mxu0
    %v562 = vadd.f32 0.0, %v561
    %563 = vmatmul.f32.gmra.mxu0 %v207
    %v564 = vpop.f32.mrf.mxu0
    %v565 = vadd.f32 0.0, %v564
    %566 = vmatmul.f32.gmra.mxu0 %v210
    %v567 = vpop.f32.mrf.mxu0
    %v568 = vadd.f32 0.0, %v567
    %569 = vmatmul.f32.gmra.mxu0 %v213
    %v570 = vpop.f32.mrf.mxu0
    %v571 = vadd.f32 0.0, %v570
    %572 = vmatmul.f32.gmra.mxu0 %v216
    %v573 = vpop.f32.mrf.mxu0
    %v574 = vadd.f32 0.0, %v573
    %575 = vmatmul.f32.gmra.mxu0 %v219
    %v576 = vpop.f32.mrf.mxu0
    %v577 = vadd.f32 0.0, %v576
    %578 = vmatmul.f32.gmra.mxu0 %v222
    %v579 = vpop.f32.mrf.mxu0
    %v580 = vadd.f32 0.0, %v579
    %581 = vmatmul.f32.gmra.mxu0 %v225
    %v582 = vpop.f32.mrf.mxu0
    %v583 = vadd.f32 0.0, %v582
    %584 = vmatmul.f32.gmra.mxu0 %v228
    %v585 = vpop.f32.mrf.mxu0
    %v586 = vadd.f32 0.0, %v585
    %587 = vmatmul.f32.gmra.mxu0 %v231
    %v588 = vpop.f32.mrf.mxu0
    %v589 = vadd.f32 0.0, %v588
    %590 = vmatmul.f32.gmra.mxu0 %v234
    %v591 = vpop.f32.mrf.mxu0
    %v592 = vadd.f32 0.0, %v591
    %593 = vmatmul.f32.gmra.mxu0 %v237
    %v594 = vpop.f32.mrf.mxu0
    %v595 = vadd.f32 0.0, %v594
    %596 = vmatmul.f32.gmra.mxu0 %v240
    %v597 = vpop.f32.mrf.mxu0
    %v598 = vadd.f32 0.0, %v597
    %599 = vmatmul.f32.gmra.mxu0 %v243
    %v600 = vpop.f32.mrf.mxu0
    %v601 = vadd.f32 0.0, %v600
    %602 = vmatmul.f32.gmra.mxu0 %v246
    %v603 = vpop.f32.mrf.mxu0
    %v604 = vadd.f32 0.0, %v603
    %605 = vmatmul.f32.gmra.mxu0 %v249
    %v606 = vpop.f32.mrf.mxu0
    %v607 = vadd.f32 0.0, %v606
    %608 = vmatmul.f32.gmra.mxu0 %v252
    %v609 = vpop.f32.mrf.mxu0
    %v610 = vadd.f32 0.0, %v609
    %611 = vmatmul.f32.gmra.mxu0 %v255
    %v612 = vpop.f32.mrf.mxu0
    %v613 = vadd.f32 0.0, %v612
    %614 = vmatmul.f32.gmra.mxu0 %v258
    %v615 = vpop.f32.mrf.mxu0
    %v616 = vadd.f32 0.0, %v615
    %617 = vmatmul.f32.gmra.mxu0 %v261
    %v618 = vpop.f32.mrf.mxu0
    %v619 = vadd.f32 0.0, %v618
    %620 = vmatmul.f32.gmra.mxu0 %v264
    %v621 = vpop.f32.mrf.mxu0
    %v622 = vadd.f32 0.0, %v621
    %623 = vmatmul.f32.gmra.mxu0 %v267
    %v624 = vpop.f32.mrf.mxu0
    %v625 = vadd.f32 0.0, %v624
    %626 = vmatmul.f32.gmra.mxu0 %v270
    %v627 = vpop.f32.mrf.mxu0
    %v628 = vadd.f32 0.0, %v627
    %629 = vmatmul.f32.gmra.mxu0 %v273
    %v630 = vpop.f32.mrf.mxu0
    %v631 = vadd.f32 0.0, %v630
    %632 = vmatmul.f32.gmra.mxu0 %v276
    %v633 = vpop.f32.mrf.mxu0
    %v634 = vadd.f32 0.0, %v633
    %635 = vmatmul.f32.gmra.mxu0 %v279
    %v636 = vpop.f32.mrf.mxu0
    %v637 = vadd.f32 0.0, %v636
    %638 = vmatmul.f32.gmra.mxu0 %v282
    %v639 = vpop.f32.mrf.mxu0
    %v640 = vadd.f32 0.0, %v639
    %641 = vmatmul.f32.gmra.mxu0 %v285
    %v642 = vpop.f32.mrf.mxu0
    %v643 = vadd.f32 0.0, %v642
    %644 = vmatmul.f32.gmra.mxu0 %v288
    %v645 = vpop.f32.mrf.mxu0
    %v646 = vadd.f32 0.0, %v645
    %647 = vmatmul.f32.gmra.mxu0 %v291
    %v648 = vpop.f32.mrf.mxu0
    %v649 = vadd.f32 0.0, %v648
    %650 = vmatmul.f32.gmra.mxu0 %v294
    %v651 = vpop.f32.mrf.mxu0
    %v652 = vadd.f32 0.0, %v651
    %653 = vmatmul.f32.gmra.mxu0 %v297
    %v654 = vpop.f32.mrf.mxu0
    %v655 = vadd.f32 0.0, %v654
    %656 = vmatmul.f32.gmra.mxu0 %v300
    %v657 = vpop.f32.mrf.mxu0
    %v658 = vadd.f32 0.0, %v657
    %659 = vmatmul.f32.gmra.mxu0 %v303
    %v660 = vpop.f32.mrf.mxu0
    %v661 = vadd.f32 0.0, %v660
    %662 = vmatmul.f32.gmra.mxu0 %v306
    %v663 = vpop.f32.mrf.mxu0
    %v664 = vadd.f32 0.0, %v663
    %665 = vdwg.mxu0
    %666 = vmatpush.msra.mxu0 0.0
    %667 = vmatpush.msra.mxu0 0.0
    %668 = vmatpush.msra.mxu0 0.0
    %669 = vmatpush.msra.mxu0 0.0
    %670 = vmatpush.msra.mxu0 0.0
    %671 = vmatpush.msra.mxu0 0.0
    %672 = vmatpush.msra.mxu0 0.0
    %673 = vmatpush.msra.mxu0 %v140
    %674 = vmatpush.msra.mxu0 %v133
    %675 = vmatpush.msra.mxu0 %v126
    %676 = vmatpush.msra.mxu0 %v119
    %677 = vmatpush.msra.mxu0 %v112
    %678 = vmatpush.msra.mxu0 %v105
    %679 = vmatpush.msra.mxu0 %v98
    %680 = vmatpush.msra.mxu0 %v91
    %681 = vmatpush.msra.mxu0 %v84
    %682 = vmatmul.f32.gmra.mxu0 %v147
    %v683 = vpop.f32.mrf.mxu0
    %v684 = vadd.f32 0.0, %v683
    %685 = vmatmul.f32.gmra.mxu0 %v150
    %v686 = vpop.f32.mrf.mxu0
    %v687 = vadd.f32 0.0, %v686
    %688 = vmatmul.f32.gmra.mxu0 %v153
    %v689 = vpop.f32.mrf.mxu0
    %v690 = vadd.f32 0.0, %v689
    %691 = vmatmul.f32.gmra.mxu0 %v156
    %v692 = vpop.f32.mrf.mxu0
    %v693 = vadd.f32 0.0, %v692
    %694 = vmatmul.f32.gmra.mxu0 %v159
    %v695 = vpop.f32.mrf.mxu0
    %v696 = vadd.f32 0.0, %v695
    %697 = vmatmul.f32.gmra.mxu0 %v162
    %v698 = vpop.f32.mrf.mxu0
    %v699 = vadd.f32 0.0, %v698
    %700 = vmatmul.f32.gmra.mxu0 %v165
    %v701 = vpop.f32.mrf.mxu0
    %v702 = vadd.f32 0.0, %v701
    %703 = vmatmul.f32.gmra.mxu0 %v168
    %v704 = vpop.f32.mrf.mxu0
    %v705 = vadd.f32 0.0, %v704
    %706 = vmatmul.f32.gmra.mxu0 %v171
    %v707 = vpop.f32.mrf.mxu0
    %v708 = vadd.f32 0.0, %v707
    %709 = vmatmul.f32.gmra.mxu0 %v174
    %v710 = vpop.f32.mrf.mxu0
    %v711 = vadd.f32 0.0, %v710
    %712 = vmatmul.f32.gmra.mxu0 %v177
    %v713 = vpop.f32.mrf.mxu0
    %v714 = vadd.f32 0.0, %v713
    %715 = vmatmul.f32.gmra.mxu0 %v180
    %v716 = vpop.f32.mrf.mxu0
    %v717 = vadd.f32 0.0, %v716
    %718 = vmatmul.f32.gmra.mxu0 %v183
    %v719 = vpop.f32.mrf.mxu0
    %v720 = vadd.f32 0.0, %v719
    %721 = vmatmul.f32.gmra.mxu0 %v186
    %v722 = vpop.f32.mrf.mxu0
    %v723 = vadd.f32 0.0, %v722
    %724 = vmatmul.f32.gmra.mxu0 %v189
    %v725 = vpop.f32.mrf.mxu0
    %v726 = vadd.f32 0.0, %v725
    %727 = vmatmul.f32.gmra.mxu0 %v192
    %v728 = vpop.f32.mrf.mxu0
    %v729 = vadd.f32 0.0, %v728
    %730 = vmatmul.f32.gmra.mxu0 %v195
    %v731 = vpop.f32.mrf.mxu0
    %v732 = vadd.f32 0.0, %v731
    %733 = vmatmul.f32.gmra.mxu0 %v198
    %v734 = vpop.f32.mrf.mxu0
    %v735 = vadd.f32 0.0, %v734
    %736 = vmatmul.f32.gmra.mxu0 %v201
    %v737 = vpop.f32.mrf.mxu0
    %v738 = vadd.f32 0.0, %v737
    %739 = vmatmul.f32.gmra.mxu0 %v204
    %v740 = vpop.f32.mrf.mxu0
    %v741 = vadd.f32 0.0, %v740
    %742 = vmatmul.f32.gmra.mxu0 %v207
    %v743 = vpop.f32.mrf.mxu0
    %v744 = vadd.f32 0.0, %v743
    %745 = vmatmul.f32.gmra.mxu0 %v210
    %v746 = vpop.f32.mrf.mxu0
    %v747 = vadd.f32 0.0, %v746
    %748 = vmatmul.f32.gmra.mxu0 %v213
    %v749 = vpop.f32.mrf.mxu0
    %v750 = vadd.f32 0.0, %v749
    %751 = vmatmul.f32.gmra.mxu0 %v216
    %v752 = vpop.f32.mrf.mxu0
    %v753 = vadd.f32 0.0, %v752
    %754 = vmatmul.f32.gmra.mxu0 %v219
    %v755 = vpop.f32.mrf.mxu0
    %v756 = vadd.f32 0.0, %v755
    %757 = vmatmul.f32.gmra.mxu0 %v222
    %v758 = vpop.f32.mrf.mxu0
    %v759 = vadd.f32 0.0, %v758
    %760 = vmatmul.f32.gmra.mxu0 %v225
    %v761 = vpop.f32.mrf.mxu0
    %v762 = vadd.f32 0.0, %v761
    %763 = vmatmul.f32.gmra.mxu0 %v228
    %v764 = vpop.f32.mrf.mxu0
    %v765 = vadd.f32 0.0, %v764
    %766 = vmatmul.f32.gmra.mxu0 %v231
    %v767 = vpop.f32.mrf.mxu0
    %v768 = vadd.f32 0.0, %v767
    %769 = vmatmul.f32.gmra.mxu0 %v234
    %v770 = vpop.f32.mrf.mxu0
    %v771 = vadd.f32 0.0, %v770
    %772 = vmatmul.f32.gmra.mxu0 %v237
    %v773 = vpop.f32.mrf.mxu0
    %v774 = vadd.f32 0.0, %v773
    %775 = vmatmul.f32.gmra.mxu0 %v240
    %v776 = vpop.f32.mrf.mxu0
    %v777 = vadd.f32 0.0, %v776
    %778 = vmatmul.f32.gmra.mxu0 %v243
    %v779 = vpop.f32.mrf.mxu0
    %v780 = vadd.f32 0.0, %v779
    %781 = vmatmul.f32.gmra.mxu0 %v246
    %v782 = vpop.f32.mrf.mxu0
    %v783 = vadd.f32 0.0, %v782
    %784 = vmatmul.f32.gmra.mxu0 %v249
    %v785 = vpop.f32.mrf.mxu0
    %v786 = vadd.f32 0.0, %v785
    %787 = vmatmul.f32.gmra.mxu0 %v252
    %v788 = vpop.f32.mrf.mxu0
    %v789 = vadd.f32 0.0, %v788
    %790 = vmatmul.f32.gmra.mxu0 %v255
    %v791 = vpop.f32.mrf.mxu0
    %v792 = vadd.f32 0.0, %v791
    %793 = vmatmul.f32.gmra.mxu0 %v258
    %v794 = vpop.f32.mrf.mxu0
    %v795 = vadd.f32 0.0, %v794
    %796 = vmatmul.f32.gmra.mxu0 %v261
    %v797 = vpop.f32.mrf.mxu0
    %v798 = vadd.f32 0.0, %v797
    %799 = vmatmul.f32.gmra.mxu0 %v264
    %v800 = vpop.f32.mrf.mxu0
    %v801 = vadd.f32 0.0, %v800
    %802 = vmatmul.f32.gmra.mxu0 %v267
    %v803 = vpop.f32.mrf.mxu0
    %v804 = vadd.f32 0.0, %v803
    %805 = vmatmul.f32.gmra.mxu0 %v270
    %v806 = vpop.f32.mrf.mxu0
    %v807 = vadd.f32 0.0, %v806
    %808 = vmatmul.f32.gmra.mxu0 %v273
    %v809 = vpop.f32.mrf.mxu0
    %v810 = vadd.f32 0.0, %v809
    %811 = vmatmul.f32.gmra.mxu0 %v276
    %v812 = vpop.f32.mrf.mxu0
    %v813 = vadd.f32 0.0, %v812
    %814 = vmatmul.f32.gmra.mxu0 %v279
    %v815 = vpop.f32.mrf.mxu0
    %v816 = vadd.f32 0.0, %v815
    %817 = vmatmul.f32.gmra.mxu0 %v282
    %v818 = vpop.f32.mrf.mxu0
    %v819 = vadd.f32 0.0, %v818
    %820 = vmatmul.f32.gmra.mxu0 %v285
    %v821 = vpop.f32.mrf.mxu0
    %v822 = vadd.f32 0.0, %v821
    %823 = vmatmul.f32.gmra.mxu0 %v288
    %v824 = vpop.f32.mrf.mxu0
    %v825 = vadd.f32 0.0, %v824
    %826 = vmatmul.f32.gmra.mxu0 %v291
    %v827 = vpop.f32.mrf.mxu0
    %v828 = vadd.f32 0.0, %v827
    %829 = vmatmul.f32.gmra.mxu0 %v294
    %v830 = vpop.f32.mrf.mxu0
    %v831 = vadd.f32 0.0, %v830
    %832 = vmatmul.f32.gmra.mxu0 %v297
    %v833 = vpop.f32.mrf.mxu0
    %v834 = vadd.f32 0.0, %v833
    %835 = vmatmul.f32.gmra.mxu0 %v300
    %v836 = vpop.f32.mrf.mxu0
    %v837 = vadd.f32 0.0, %v836
    %838 = vmatmul.f32.gmra.mxu0 %v303
    %v839 = vpop.f32.mrf.mxu0
    %v840 = vadd.f32 0.0, %v839
    %841 = vmatmul.f32.gmra.mxu0 %v306
    %v842 = vpop.f32.mrf.mxu0
    %v843 = vadd.f32 0.0, %v842
    %844 = vdwg.mxu0
    %845 = vmatpush.msra.mxu0 0.0
    %846 = vmatpush.msra.mxu0 0.0
    %847 = vmatpush.msra.mxu0 0.0
    %848 = vmatpush.msra.mxu0 0.0
    %849 = vmatpush.msra.mxu0 0.0
    %850 = vmatpush.msra.mxu0 0.0
    %851 = vmatpush.msra.mxu0 0.0
    %852 = vmatpush.msra.mxu0 %v141
    %853 = vmatpush.msra.mxu0 %v134
    %854 = vmatpush.msra.mxu0 %v127
    %855 = vmatpush.msra.mxu0 %v120
    %856 = vmatpush.msra.mxu0 %v113
    %857 = vmatpush.msra.mxu0 %v106
    %858 = vmatpush.msra.mxu0 %v99
    %859 = vmatpush.msra.mxu0 %v92
    %860 = vmatpush.msra.mxu0 %v85
    %861 = vmatmul.f32.gmra.mxu0 %v147
    %v862 = vpop.f32.mrf.mxu0
    %v863 = vadd.f32 0.0, %v862
    %864 = vmatmul.f32.gmra.mxu0 %v150
    %v865 = vpop.f32.mrf.mxu0
    %v866 = vadd.f32 0.0, %v865
    %867 = vmatmul.f32.gmra.mxu0 %v153
    %v868 = vpop.f32.mrf.mxu0
    %v869 = vadd.f32 0.0, %v868
    %870 = vmatmul.f32.gmra.mxu0 %v156
    %v871 = vpop.f32.mrf.mxu0
    %v872 = vadd.f32 0.0, %v871
    %873 = vmatmul.f32.gmra.mxu0 %v159
    %v874 = vpop.f32.mrf.mxu0
    %v875 = vadd.f32 0.0, %v874
    %876 = vmatmul.f32.gmra.mxu0 %v162
    %v877 = vpop.f32.mrf.mxu0
    %v878 = vadd.f32 0.0, %v877
    %879 = vmatmul.f32.gmra.mxu0 %v165
    %v880 = vpop.f32.mrf.mxu0
    %v881 = vadd.f32 0.0, %v880
    %882 = vmatmul.f32.gmra.mxu0 %v168
    %v883 = vpop.f32.mrf.mxu0
    %v884 = vadd.f32 0.0, %v883
    %885 = vmatmul.f32.gmra.mxu0 %v171
    %v886 = vpop.f32.mrf.mxu0
    %v887 = vadd.f32 0.0, %v886
    %888 = vmatmul.f32.gmra.mxu0 %v174
    %v889 = vpop.f32.mrf.mxu0
    %v890 = vadd.f32 0.0, %v889
    %891 = vmatmul.f32.gmra.mxu0 %v177
    %v892 = vpop.f32.mrf.mxu0
    %v893 = vadd.f32 0.0, %v892
    %894 = vmatmul.f32.gmra.mxu0 %v180
    %v895 = vpop.f32.mrf.mxu0
    %v896 = vadd.f32 0.0, %v895
    %897 = vmatmul.f32.gmra.mxu0 %v183
    %v898 = vpop.f32.mrf.mxu0
    %v899 = vadd.f32 0.0, %v898
    %900 = vmatmul.f32.gmra.mxu0 %v186
    %v901 = vpop.f32.mrf.mxu0
    %v902 = vadd.f32 0.0, %v901
    %903 = vmatmul.f32.gmra.mxu0 %v189
    %v904 = vpop.f32.mrf.mxu0
    %v905 = vadd.f32 0.0, %v904
    %906 = vmatmul.f32.gmra.mxu0 %v192
    %v907 = vpop.f32.mrf.mxu0
    %v908 = vadd.f32 0.0, %v907
    %909 = vmatmul.f32.gmra.mxu0 %v195
    %v910 = vpop.f32.mrf.mxu0
    %v911 = vadd.f32 0.0, %v910
    %912 = vmatmul.f32.gmra.mxu0 %v198
    %v913 = vpop.f32.mrf.mxu0
    %v914 = vadd.f32 0.0, %v913
    %915 = vmatmul.f32.gmra.mxu0 %v201
    %v916 = vpop.f32.mrf.mxu0
    %v917 = vadd.f32 0.0, %v916
    %918 = vmatmul.f32.gmra.mxu0 %v204
    %v919 = vpop.f32.mrf.mxu0
    %v920 = vadd.f32 0.0, %v919
    %921 = vmatmul.f32.gmra.mxu0 %v207
    %v922 = vpop.f32.mrf.mxu0
    %v923 = vadd.f32 0.0, %v922
    %924 = vmatmul.f32.gmra.mxu0 %v210
    %v925 = vpop.f32.mrf.mxu0
    %v926 = vadd.f32 0.0, %v925
    %927 = vmatmul.f32.gmra.mxu0 %v213
    %v928 = vpop.f32.mrf.mxu0
    %v929 = vadd.f32 0.0, %v928
    %930 = vmatmul.f32.gmra.mxu0 %v216
    %v931 = vpop.f32.mrf.mxu0
    %v932 = vadd.f32 0.0, %v931
    %933 = vmatmul.f32.gmra.mxu0 %v219
    %v934 = vpop.f32.mrf.mxu0
    %v935 = vadd.f32 0.0, %v934
    %936 = vmatmul.f32.gmra.mxu0 %v222
    %v937 = vpop.f32.mrf.mxu0
    %v938 = vadd.f32 0.0, %v937
    %939 = vmatmul.f32.gmra.mxu0 %v225
    %v940 = vpop.f32.mrf.mxu0
    %v941 = vadd.f32 0.0, %v940
    %942 = vmatmul.f32.gmra.mxu0 %v228
    %v943 = vpop.f32.mrf.mxu0
    %v944 = vadd.f32 0.0, %v943
    %945 = vmatmul.f32.gmra.mxu0 %v231
    %v946 = vpop.f32.mrf.mxu0
    %v947 = vadd.f32 0.0, %v946
    %948 = vmatmul.f32.gmra.mxu0 %v234
    %v949 = vpop.f32.mrf.mxu0
    %v950 = vadd.f32 0.0, %v949
    %951 = vmatmul.f32.gmra.mxu0 %v237
    %v952 = vpop.f32.mrf.mxu0
    %v953 = vadd.f32 0.0, %v952
    %954 = vmatmul.f32.gmra.mxu0 %v240
    %v955 = vpop.f32.mrf.mxu0
    %v956 = vadd.f32 0.0, %v955
    %957 = vmatmul.f32.gmra.mxu0 %v243
    %v958 = vpop.f32.mrf.mxu0
    %v959 = vadd.f32 0.0, %v958
    %960 = vmatmul.f32.gmra.mxu0 %v246
    %v961 = vpop.f32.mrf.mxu0
    %v962 = vadd.f32 0.0, %v961
    %963 = vmatmul.f32.gmra.mxu0 %v249
    %v964 = vpop.f32.mrf.mxu0
    %v965 = vadd.f32 0.0, %v964
    %966 = vmatmul.f32.gmra.mxu0 %v252
    %v967 = vpop.f32.mrf.mxu0
    %v968 = vadd.f32 0.0, %v967
    %969 = vmatmul.f32.gmra.mxu0 %v255
    %v970 = vpop.f32.mrf.mxu0
    %v971 = vadd.f32 0.0, %v970
    %972 = vmatmul.f32.gmra.mxu0 %v258
    %v973 = vpop.f32.mrf.mxu0
    %v974 = vadd.f32 0.0, %v973
    %975 = vmatmul.f32.gmra.mxu0 %v261
    %v976 = vpop.f32.mrf.mxu0
    %v977 = vadd.f32 0.0, %v976
    %978 = vmatmul.f32.gmra.mxu0 %v264
    %v979 = vpop.f32.mrf.mxu0
    %v980 = vadd.f32 0.0, %v979
    %981 = vmatmul.f32.gmra.mxu0 %v267
    %v982 = vpop.f32.mrf.mxu0
    %v983 = vadd.f32 0.0, %v982
    %984 = vmatmul.f32.gmra.mxu0 %v270
    %v985 = vpop.f32.mrf.mxu0
    %v986 = vadd.f32 0.0, %v985
    %987 = vmatmul.f32.gmra.mxu0 %v273
    %v988 = vpop.f32.mrf.mxu0
    %v989 = vadd.f32 0.0, %v988
    %990 = vmatmul.f32.gmra.mxu0 %v276
    %v991 = vpop.f32.mrf.mxu0
    %v992 = vadd.f32 0.0, %v991
    %993 = vmatmul.f32.gmra.mxu0 %v279
    %v994 = vpop.f32.mrf.mxu0
    %v995 = vadd.f32 0.0, %v994
    %996 = vmatmul.f32.gmra.mxu0 %v282
    %v997 = vpop.f32.mrf.mxu0
    %v998 = vadd.f32 0.0, %v997
    %999 = vmatmul.f32.gmra.mxu0 %v285
    %v1000 = vpop.f32.mrf.mxu0
    %v1001 = vadd.f32 0.0, %v1000
    %1002 = vmatmul.f32.gmra.mxu0 %v288
    %v1003 = vpop.f32.mrf.mxu0
    %v1004 = vadd.f32 0.0, %v1003
    %1005 = vmatmul.f32.gmra.mxu0 %v291
    %v1006 = vpop.f32.mrf.mxu0
    %v1007 = vadd.f32 0.0, %v1006
    %1008 = vmatmul.f32.gmra.mxu0 %v294
    %v1009 = vpop.f32.mrf.mxu0
    %v1010 = vadd.f32 0.0, %v1009
    %1011 = vmatmul.f32.gmra.mxu0 %v297
    %v1012 = vpop.f32.mrf.mxu0
    %v1013 = vadd.f32 0.0, %v1012
    %1014 = vmatmul.f32.gmra.mxu0 %v300
    %v1015 = vpop.f32.mrf.mxu0
    %v1016 = vadd.f32 0.0, %v1015
    %1017 = vmatmul.f32.gmra.mxu0 %v303
    %v1018 = vpop.f32.mrf.mxu0
    %v1019 = vadd.f32 0.0, %v1018
    %1020 = vmatmul.f32.gmra.mxu0 %v306
    %v1021 = vpop.f32.mrf.mxu0
    %v1022 = vadd.f32 0.0, %v1021
    %1023 = vdwg.mxu0
    %1024 = vmatpush.msra.mxu0 0.0
    %1025 = vmatpush.msra.mxu0 0.0
    %1026 = vmatpush.msra.mxu0 0.0
    %1027 = vmatpush.msra.mxu0 0.0
    %1028 = vmatpush.msra.mxu0 0.0
    %1029 = vmatpush.msra.mxu0 0.0
    %1030 = vmatpush.msra.mxu0 0.0
    %1031 = vmatpush.msra.mxu0 %v142
    %1032 = vmatpush.msra.mxu0 %v135
    %1033 = vmatpush.msra.mxu0 %v128
    %1034 = vmatpush.msra.mxu0 %v121
    %1035 = vmatpush.msra.mxu0 %v114
    %1036 = vmatpush.msra.mxu0 %v107
    %1037 = vmatpush.msra.mxu0 %v100
    %1038 = vmatpush.msra.mxu0 %v93
    %1039 = vmatpush.msra.mxu0 %v86
    %1040 = vmatmul.f32.gmra.mxu0 %v147
    %v1041 = vpop.f32.mrf.mxu0
    %v1042 = vadd.f32 0.0, %v1041
    %1043 = vmatmul.f32.gmra.mxu0 %v150
    %v1044 = vpop.f32.mrf.mxu0
    %v1045 = vadd.f32 0.0, %v1044
    %1046 = vmatmul.f32.gmra.mxu0 %v153
    %v1047 = vpop.f32.mrf.mxu0
    %v1048 = vadd.f32 0.0, %v1047
    %1049 = vmatmul.f32.gmra.mxu0 %v156
    %v1050 = vpop.f32.mrf.mxu0
    %v1051 = vadd.f32 0.0, %v1050
    %1052 = vmatmul.f32.gmra.mxu0 %v159
    %v1053 = vpop.f32.mrf.mxu0
    %v1054 = vadd.f32 0.0, %v1053
    %1055 = vmatmul.f32.gmra.mxu0 %v162
    %v1056 = vpop.f32.mrf.mxu0
    %v1057 = vadd.f32 0.0, %v1056
    %1058 = vmatmul.f32.gmra.mxu0 %v165
    %v1059 = vpop.f32.mrf.mxu0
    %v1060 = vadd.f32 0.0, %v1059
    %1061 = vmatmul.f32.gmra.mxu0 %v168
    %v1062 = vpop.f32.mrf.mxu0
    %v1063 = vadd.f32 0.0, %v1062
    %1064 = vmatmul.f32.gmra.mxu0 %v171
    %v1065 = vpop.f32.mrf.mxu0
    %v1066 = vadd.f32 0.0, %v1065
    %1067 = vmatmul.f32.gmra.mxu0 %v174
    %v1068 = vpop.f32.mrf.mxu0
    %v1069 = vadd.f32 0.0, %v1068
    %1070 = vmatmul.f32.gmra.mxu0 %v177
    %v1071 = vpop.f32.mrf.mxu0
    %v1072 = vadd.f32 0.0, %v1071
    %1073 = vmatmul.f32.gmra.mxu0 %v180
    %v1074 = vpop.f32.mrf.mxu0
    %v1075 = vadd.f32 0.0, %v1074
    %1076 = vmatmul.f32.gmra.mxu0 %v183
    %v1077 = vpop.f32.mrf.mxu0
    %v1078 = vadd.f32 0.0, %v1077
    %1079 = vmatmul.f32.gmra.mxu0 %v186
    %v1080 = vpop.f32.mrf.mxu0
    %v1081 = vadd.f32 0.0, %v1080
    %1082 = vmatmul.f32.gmra.mxu0 %v189
    %v1083 = vpop.f32.mrf.mxu0
    %v1084 = vadd.f32 0.0, %v1083
    %1085 = vmatmul.f32.gmra.mxu0 %v192
    %v1086 = vpop.f32.mrf.mxu0
    %v1087 = vadd.f32 0.0, %v1086
    %1088 = vmatmul.f32.gmra.mxu0 %v195
    %v1089 = vpop.f32.mrf.mxu0
    %v1090 = vadd.f32 0.0, %v1089
    %1091 = vmatmul.f32.gmra.mxu0 %v198
    %v1092 = vpop.f32.mrf.mxu0
    %v1093 = vadd.f32 0.0, %v1092
    %1094 = vmatmul.f32.gmra.mxu0 %v201
    %v1095 = vpop.f32.mrf.mxu0
    %v1096 = vadd.f32 0.0, %v1095
    %1097 = vmatmul.f32.gmra.mxu0 %v204
    %v1098 = vpop.f32.mrf.mxu0
    %v1099 = vadd.f32 0.0, %v1098
    %1100 = vmatmul.f32.gmra.mxu0 %v207
    %v1101 = vpop.f32.mrf.mxu0
    %v1102 = vadd.f32 0.0, %v1101
    %1103 = vmatmul.f32.gmra.mxu0 %v210
    %v1104 = vpop.f32.mrf.mxu0
    %v1105 = vadd.f32 0.0, %v1104
    %1106 = vmatmul.f32.gmra.mxu0 %v213
    %v1107 = vpop.f32.mrf.mxu0
    %v1108 = vadd.f32 0.0, %v1107
    %1109 = vmatmul.f32.gmra.mxu0 %v216
    %v1110 = vpop.f32.mrf.mxu0
    %v1111 = vadd.f32 0.0, %v1110
    %1112 = vmatmul.f32.gmra.mxu0 %v219
    %v1113 = vpop.f32.mrf.mxu0
    %v1114 = vadd.f32 0.0, %v1113
    %1115 = vmatmul.f32.gmra.mxu0 %v222
    %v1116 = vpop.f32.mrf.mxu0
    %v1117 = vadd.f32 0.0, %v1116
    %1118 = vmatmul.f32.gmra.mxu0 %v225
    %v1119 = vpop.f32.mrf.mxu0
    %v1120 = vadd.f32 0.0, %v1119
    %1121 = vmatmul.f32.gmra.mxu0 %v228
    %v1122 = vpop.f32.mrf.mxu0
    %v1123 = vadd.f32 0.0, %v1122
    %1124 = vmatmul.f32.gmra.mxu0 %v231
    %v1125 = vpop.f32.mrf.mxu0
    %v1126 = vadd.f32 0.0, %v1125
    %1127 = vmatmul.f32.gmra.mxu0 %v234
    %v1128 = vpop.f32.mrf.mxu0
    %v1129 = vadd.f32 0.0, %v1128
    %1130 = vmatmul.f32.gmra.mxu0 %v237
    %v1131 = vpop.f32.mrf.mxu0
    %v1132 = vadd.f32 0.0, %v1131
    %1133 = vmatmul.f32.gmra.mxu0 %v240
    %v1134 = vpop.f32.mrf.mxu0
    %v1135 = vadd.f32 0.0, %v1134
    %1136 = vmatmul.f32.gmra.mxu0 %v243
    %v1137 = vpop.f32.mrf.mxu0
    %v1138 = vadd.f32 0.0, %v1137
    %1139 = vmatmul.f32.gmra.mxu0 %v246
    %v1140 = vpop.f32.mrf.mxu0
    %v1141 = vadd.f32 0.0, %v1140
    %1142 = vmatmul.f32.gmra.mxu0 %v249
    %v1143 = vpop.f32.mrf.mxu0
    %v1144 = vadd.f32 0.0, %v1143
    %1145 = vmatmul.f32.gmra.mxu0 %v252
    %v1146 = vpop.f32.mrf.mxu0
    %v1147 = vadd.f32 0.0, %v1146
    %1148 = vmatmul.f32.gmra.mxu0 %v255
    %v1149 = vpop.f32.mrf.mxu0
    %v1150 = vadd.f32 0.0, %v1149
    %1151 = vmatmul.f32.gmra.mxu0 %v258
    %v1152 = vpop.f32.mrf.mxu0
    %v1153 = vadd.f32 0.0, %v1152
    %1154 = vmatmul.f32.gmra.mxu0 %v261
    %v1155 = vpop.f32.mrf.mxu0
    %v1156 = vadd.f32 0.0, %v1155
    %1157 = vmatmul.f32.gmra.mxu0 %v264
    %v1158 = vpop.f32.mrf.mxu0
    %v1159 = vadd.f32 0.0, %v1158
    %1160 = vmatmul.f32.gmra.mxu0 %v267
    %v1161 = vpop.f32.mrf.mxu0
    %v1162 = vadd.f32 0.0, %v1161
    %1163 = vmatmul.f32.gmra.mxu0 %v270
    %v1164 = vpop.f32.mrf.mxu0
    %v1165 = vadd.f32 0.0, %v1164
    %1166 = vmatmul.f32.gmra.mxu0 %v273
    %v1167 = vpop.f32.mrf.mxu0
    %v1168 = vadd.f32 0.0, %v1167
    %1169 = vmatmul.f32.gmra.mxu0 %v276
    %v1170 = vpop.f32.mrf.mxu0
    %v1171 = vadd.f32 0.0, %v1170
    %1172 = vmatmul.f32.gmra.mxu0 %v279
    %v1173 = vpop.f32.mrf.mxu0
    %v1174 = vadd.f32 0.0, %v1173
    %1175 = vmatmul.f32.gmra.mxu0 %v282
    %v1176 = vpop.f32.mrf.mxu0
    %v1177 = vadd.f32 0.0, %v1176
    %1178 = vmatmul.f32.gmra.mxu0 %v285
    %v1179 = vpop.f32.mrf.mxu0
    %v1180 = vadd.f32 0.0, %v1179
    %1181 = vmatmul.f32.gmra.mxu0 %v288
    %v1182 = vpop.f32.mrf.mxu0
    %v1183 = vadd.f32 0.0, %v1182
    %1184 = vmatmul.f32.gmra.mxu0 %v291
    %v1185 = vpop.f32.mrf.mxu0
    %v1186 = vadd.f32 0.0, %v1185
    %1187 = vmatmul.f32.gmra.mxu0 %v294
    %v1188 = vpop.f32.mrf.mxu0
    %v1189 = vadd.f32 0.0, %v1188
    %1190 = vmatmul.f32.gmra.mxu0 %v297
    %v1191 = vpop.f32.mrf.mxu0
    %v1192 = vadd.f32 0.0, %v1191
    %1193 = vmatmul.f32.gmra.mxu0 %v300
    %v1194 = vpop.f32.mrf.mxu0
    %v1195 = vadd.f32 0.0, %v1194
    %1196 = vmatmul.f32.gmra.mxu0 %v303
    %v1197 = vpop.f32.mrf.mxu0
    %v1198 = vadd.f32 0.0, %v1197
    %1199 = vmatmul.f32.gmra.mxu0 %v306
    %v1200 = vpop.f32.mrf.mxu0
    %v1201 = vadd.f32 0.0, %v1200
    %1202 = vdwg.mxu0
    %1203 = vmatpush.msra.mxu0 0.0
    %1204 = vmatpush.msra.mxu0 0.0
    %1205 = vmatpush.msra.mxu0 0.0
    %1206 = vmatpush.msra.mxu0 0.0
    %1207 = vmatpush.msra.mxu0 0.0
    %1208 = vmatpush.msra.mxu0 0.0
    %1209 = vmatpush.msra.mxu0 0.0
    %1210 = vmatpush.msra.mxu0 %v143
    %1211 = vmatpush.msra.mxu0 %v136
    %1212 = vmatpush.msra.mxu0 %v129
    %1213 = vmatpush.msra.mxu0 %v122
    %1214 = vmatpush.msra.mxu0 %v115
    %1215 = vmatpush.msra.mxu0 %v108
    %1216 = vmatpush.msra.mxu0 %v101
    %1217 = vmatpush.msra.mxu0 %v94
    %1218 = vmatpush.msra.mxu0 %v87
    %1219 = vmatmul.f32.gmra.mxu0 %v147
    %v1220 = vpop.f32.mrf.mxu0
    %v1221 = vadd.f32 0.0, %v1220
    %1222 = vmatmul.f32.gmra.mxu0 %v150
    %v1223 = vpop.f32.mrf.mxu0
    %v1224 = vadd.f32 0.0, %v1223
    %1225 = vmatmul.f32.gmra.mxu0 %v153
    %v1226 = vpop.f32.mrf.mxu0
    %v1227 = vadd.f32 0.0, %v1226
    %1228 = vmatmul.f32.gmra.mxu0 %v156
    %v1229 = vpop.f32.mrf.mxu0
    %v1230 = vadd.f32 0.0, %v1229
    %1231 = vmatmul.f32.gmra.mxu0 %v159
    %v1232 = vpop.f32.mrf.mxu0
    %v1233 = vadd.f32 0.0, %v1232
    %1234 = vmatmul.f32.gmra.mxu0 %v162
    %v1235 = vpop.f32.mrf.mxu0
    %v1236 = vadd.f32 0.0, %v1235
    %1237 = vmatmul.f32.gmra.mxu0 %v165
    %v1238 = vpop.f32.mrf.mxu0
    %v1239 = vadd.f32 0.0, %v1238
    %1240 = vmatmul.f32.gmra.mxu0 %v168
    %v1241 = vpop.f32.mrf.mxu0
    %v1242 = vadd.f32 0.0, %v1241
    %1243 = vmatmul.f32.gmra.mxu0 %v171
    %v1244 = vpop.f32.mrf.mxu0
    %v1245 = vadd.f32 0.0, %v1244
    %1246 = vmatmul.f32.gmra.mxu0 %v174
    %v1247 = vpop.f32.mrf.mxu0
    %v1248 = vadd.f32 0.0, %v1247
    %1249 = vmatmul.f32.gmra.mxu0 %v177
    %v1250 = vpop.f32.mrf.mxu0
    %v1251 = vadd.f32 0.0, %v1250
    %1252 = vmatmul.f32.gmra.mxu0 %v180
    %v1253 = vpop.f32.mrf.mxu0
    %v1254 = vadd.f32 0.0, %v1253
    %1255 = vmatmul.f32.gmra.mxu0 %v183
    %v1256 = vpop.f32.mrf.mxu0
    %v1257 = vadd.f32 0.0, %v1256
    %1258 = vmatmul.f32.gmra.mxu0 %v186
    %v1259 = vpop.f32.mrf.mxu0
    %v1260 = vadd.f32 0.0, %v1259
    %1261 = vmatmul.f32.gmra.mxu0 %v189
    %v1262 = vpop.f32.mrf.mxu0
    %v1263 = vadd.f32 0.0, %v1262
    %1264 = vmatmul.f32.gmra.mxu0 %v192
    %v1265 = vpop.f32.mrf.mxu0
    %v1266 = vadd.f32 0.0, %v1265
    %1267 = vmatmul.f32.gmra.mxu0 %v195
    %v1268 = vpop.f32.mrf.mxu0
    %v1269 = vadd.f32 0.0, %v1268
    %1270 = vmatmul.f32.gmra.mxu0 %v198
    %v1271 = vpop.f32.mrf.mxu0
    %v1272 = vadd.f32 0.0, %v1271
    %1273 = vmatmul.f32.gmra.mxu0 %v201
    %v1274 = vpop.f32.mrf.mxu0
    %v1275 = vadd.f32 0.0, %v1274
    %1276 = vmatmul.f32.gmra.mxu0 %v204
    %v1277 = vpop.f32.mrf.mxu0
    %v1278 = vadd.f32 0.0, %v1277
    %1279 = vmatmul.f32.gmra.mxu0 %v207
    %v1280 = vpop.f32.mrf.mxu0
    %v1281 = vadd.f32 0.0, %v1280
    %1282 = vmatmul.f32.gmra.mxu0 %v210
    %v1283 = vpop.f32.mrf.mxu0
    %v1284 = vadd.f32 0.0, %v1283
    %1285 = vmatmul.f32.gmra.mxu0 %v213
    %v1286 = vpop.f32.mrf.mxu0
    %v1287 = vadd.f32 0.0, %v1286
    %1288 = vmatmul.f32.gmra.mxu0 %v216
    %v1289 = vpop.f32.mrf.mxu0
    %v1290 = vadd.f32 0.0, %v1289
    %1291 = vmatmul.f32.gmra.mxu0 %v219
    %v1292 = vpop.f32.mrf.mxu0
    %v1293 = vadd.f32 0.0, %v1292
    %1294 = vmatmul.f32.gmra.mxu0 %v222
    %v1295 = vpop.f32.mrf.mxu0
    %v1296 = vadd.f32 0.0, %v1295
    %1297 = vmatmul.f32.gmra.mxu0 %v225
    %v1298 = vpop.f32.mrf.mxu0
    %v1299 = vadd.f32 0.0, %v1298
    %1300 = vmatmul.f32.gmra.mxu0 %v228
    %v1301 = vpop.f32.mrf.mxu0
    %v1302 = vadd.f32 0.0, %v1301
    %1303 = vmatmul.f32.gmra.mxu0 %v231
    %v1304 = vpop.f32.mrf.mxu0
    %v1305 = vadd.f32 0.0, %v1304
    %1306 = vmatmul.f32.gmra.mxu0 %v234
    %v1307 = vpop.f32.mrf.mxu0
    %v1308 = vadd.f32 0.0, %v1307
    %1309 = vmatmul.f32.gmra.mxu0 %v237
    %v1310 = vpop.f32.mrf.mxu0
    %v1311 = vadd.f32 0.0, %v1310
    %1312 = vmatmul.f32.gmra.mxu0 %v240
    %v1313 = vpop.f32.mrf.mxu0
    %v1314 = vadd.f32 0.0, %v1313
    %1315 = vmatmul.f32.gmra.mxu0 %v243
    %v1316 = vpop.f32.mrf.mxu0
    %v1317 = vadd.f32 0.0, %v1316
    %1318 = vmatmul.f32.gmra.mxu0 %v246
    %v1319 = vpop.f32.mrf.mxu0
    %v1320 = vadd.f32 0.0, %v1319
    %1321 = vmatmul.f32.gmra.mxu0 %v249
    %v1322 = vpop.f32.mrf.mxu0
    %v1323 = vadd.f32 0.0, %v1322
    %1324 = vmatmul.f32.gmra.mxu0 %v252
    %v1325 = vpop.f32.mrf.mxu0
    %v1326 = vadd.f32 0.0, %v1325
    %1327 = vmatmul.f32.gmra.mxu0 %v255
    %v1328 = vpop.f32.mrf.mxu0
    %v1329 = vadd.f32 0.0, %v1328
    %1330 = vmatmul.f32.gmra.mxu0 %v258
    %v1331 = vpop.f32.mrf.mxu0
    %v1332 = vadd.f32 0.0, %v1331
    %1333 = vmatmul.f32.gmra.mxu0 %v261
    %v1334 = vpop.f32.mrf.mxu0
    %v1335 = vadd.f32 0.0, %v1334
    %1336 = vmatmul.f32.gmra.mxu0 %v264
    %v1337 = vpop.f32.mrf.mxu0
    %v1338 = vadd.f32 0.0, %v1337
    %1339 = vmatmul.f32.gmra.mxu0 %v267
    %v1340 = vpop.f32.mrf.mxu0
    %v1341 = vadd.f32 0.0, %v1340
    %1342 = vmatmul.f32.gmra.mxu0 %v270
    %v1343 = vpop.f32.mrf.mxu0
    %v1344 = vadd.f32 0.0, %v1343
    %1345 = vmatmul.f32.gmra.mxu0 %v273
    %v1346 = vpop.f32.mrf.mxu0
    %v1347 = vadd.f32 0.0, %v1346
    %1348 = vmatmul.f32.gmra.mxu0 %v276
    %v1349 = vpop.f32.mrf.mxu0
    %v1350 = vadd.f32 0.0, %v1349
    %1351 = vmatmul.f32.gmra.mxu0 %v279
    %v1352 = vpop.f32.mrf.mxu0
    %v1353 = vadd.f32 0.0, %v1352
    %1354 = vmatmul.f32.gmra.mxu0 %v282
    %v1355 = vpop.f32.mrf.mxu0
    %v1356 = vadd.f32 0.0, %v1355
    %1357 = vmatmul.f32.gmra.mxu0 %v285
    %v1358 = vpop.f32.mrf.mxu0
    %v1359 = vadd.f32 0.0, %v1358
    %1360 = vmatmul.f32.gmra.mxu0 %v288
    %v1361 = vpop.f32.mrf.mxu0
    %v1362 = vadd.f32 0.0, %v1361
    %1363 = vmatmul.f32.gmra.mxu0 %v291
    %v1364 = vpop.f32.mrf.mxu0
    %v1365 = vadd.f32 0.0, %v1364
    %1366 = vmatmul.f32.gmra.mxu0 %v294
    %v1367 = vpop.f32.mrf.mxu0
    %v1368 = vadd.f32 0.0, %v1367
    %1369 = vmatmul.f32.gmra.mxu0 %v297
    %v1370 = vpop.f32.mrf.mxu0
    %v1371 = vadd.f32 0.0, %v1370
    %1372 = vmatmul.f32.gmra.mxu0 %v300
    %v1373 = vpop.f32.mrf.mxu0
    %v1374 = vadd.f32 0.0, %v1373
    %1375 = vmatmul.f32.gmra.mxu0 %v303
    %v1376 = vpop.f32.mrf.mxu0
    %v1377 = vadd.f32 0.0, %v1376
    %1378 = vmatmul.f32.gmra.mxu0 %v306
    %v1379 = vpop.f32.mrf.mxu0
    %v1380 = vadd.f32 0.0, %v1379
    %1381 = vdwg.mxu0
    %1382 = vmatpush.msra.mxu0 0.0
    %1383 = vmatpush.msra.mxu0 0.0
    %1384 = vmatpush.msra.mxu0 0.0
    %1385 = vmatpush.msra.mxu0 0.0
    %1386 = vmatpush.msra.mxu0 0.0
    %1387 = vmatpush.msra.mxu0 0.0
    %1388 = vmatpush.msra.mxu0 0.0
    %1389 = vmatpush.msra.mxu0 %v144
    %1390 = vmatpush.msra.mxu0 %v137
    %1391 = vmatpush.msra.mxu0 %v130
    %1392 = vmatpush.msra.mxu0 %v123
    %1393 = vmatpush.msra.mxu0 %v116
    %1394 = vmatpush.msra.mxu0 %v109
    %1395 = vmatpush.msra.mxu0 %v102
    %1396 = vmatpush.msra.mxu0 %v95
    %1397 = vmatpush.msra.mxu0 %v88
    %1398 = vmatmul.f32.gmra.mxu0 %v147
    %v1399 = vpop.f32.mrf.mxu0
    %v1400 = vadd.f32 0.0, %v1399
    %1401 = vmatmul.f32.gmra.mxu0 %v150
    %v1402 = vpop.f32.mrf.mxu0
    %v1403 = vadd.f32 0.0, %v1402
    %1404 = vmatmul.f32.gmra.mxu0 %v153
    %v1405 = vpop.f32.mrf.mxu0
    %v1406 = vadd.f32 0.0, %v1405
    %1407 = vmatmul.f32.gmra.mxu0 %v156
    %v1408 = vpop.f32.mrf.mxu0
    %v1409 = vadd.f32 0.0, %v1408
    %1410 = vmatmul.f32.gmra.mxu0 %v159
    %v1411 = vpop.f32.mrf.mxu0
    %v1412 = vadd.f32 0.0, %v1411
    %1413 = vmatmul.f32.gmra.mxu0 %v162
    %v1414 = vpop.f32.mrf.mxu0
    %v1415 = vadd.f32 0.0, %v1414
    %1416 = vmatmul.f32.gmra.mxu0 %v165
    %v1417 = vpop.f32.mrf.mxu0
    %v1418 = vadd.f32 0.0, %v1417
    %1419 = vmatmul.f32.gmra.mxu0 %v168
    %v1420 = vpop.f32.mrf.mxu0
    %v1421 = vadd.f32 0.0, %v1420
    %1422 = vmatmul.f32.gmra.mxu0 %v171
    %v1423 = vpop.f32.mrf.mxu0
    %v1424 = vadd.f32 0.0, %v1423
    %1425 = vmatmul.f32.gmra.mxu0 %v174
    %v1426 = vpop.f32.mrf.mxu0
    %v1427 = vadd.f32 0.0, %v1426
    %1428 = vmatmul.f32.gmra.mxu0 %v177
    %v1429 = vpop.f32.mrf.mxu0
    %v1430 = vadd.f32 0.0, %v1429
    %1431 = vmatmul.f32.gmra.mxu0 %v180
    %v1432 = vpop.f32.mrf.mxu0
    %v1433 = vadd.f32 0.0, %v1432
    %1434 = vmatmul.f32.gmra.mxu0 %v183
    %v1435 = vpop.f32.mrf.mxu0
    %v1436 = vadd.f32 0.0, %v1435
    %1437 = vmatmul.f32.gmra.mxu0 %v186
    %v1438 = vpop.f32.mrf.mxu0
    %v1439 = vadd.f32 0.0, %v1438
    %1440 = vmatmul.f32.gmra.mxu0 %v189
    %v1441 = vpop.f32.mrf.mxu0
    %v1442 = vadd.f32 0.0, %v1441
    %1443 = vmatmul.f32.gmra.mxu0 %v192
    %v1444 = vpop.f32.mrf.mxu0
    %v1445 = vadd.f32 0.0, %v1444
    %1446 = vmatmul.f32.gmra.mxu0 %v195
    %v1447 = vpop.f32.mrf.mxu0
    %v1448 = vadd.f32 0.0, %v1447
    %1449 = vmatmul.f32.gmra.mxu0 %v198
    %v1450 = vpop.f32.mrf.mxu0
    %v1451 = vadd.f32 0.0, %v1450
    %1452 = vmatmul.f32.gmra.mxu0 %v201
    %v1453 = vpop.f32.mrf.mxu0
    %v1454 = vadd.f32 0.0, %v1453
    %1455 = vmatmul.f32.gmra.mxu0 %v204
    %v1456 = vpop.f32.mrf.mxu0
    %v1457 = vadd.f32 0.0, %v1456
    %1458 = vmatmul.f32.gmra.mxu0 %v207
    %v1459 = vpop.f32.mrf.mxu0
    %v1460 = vadd.f32 0.0, %v1459
    %1461 = vmatmul.f32.gmra.mxu0 %v210
    %v1462 = vpop.f32.mrf.mxu0
    %v1463 = vadd.f32 0.0, %v1462
    %1464 = vmatmul.f32.gmra.mxu0 %v213
    %v1465 = vpop.f32.mrf.mxu0
    %v1466 = vadd.f32 0.0, %v1465
    %1467 = vmatmul.f32.gmra.mxu0 %v216
    %v1468 = vpop.f32.mrf.mxu0
    %v1469 = vadd.f32 0.0, %v1468
    %1470 = vmatmul.f32.gmra.mxu0 %v219
    %v1471 = vpop.f32.mrf.mxu0
    %v1472 = vadd.f32 0.0, %v1471
    %1473 = vmatmul.f32.gmra.mxu0 %v222
    %v1474 = vpop.f32.mrf.mxu0
    %v1475 = vadd.f32 0.0, %v1474
    %1476 = vmatmul.f32.gmra.mxu0 %v225
    %v1477 = vpop.f32.mrf.mxu0
    %v1478 = vadd.f32 0.0, %v1477
    %1479 = vmatmul.f32.gmra.mxu0 %v228
    %v1480 = vpop.f32.mrf.mxu0
    %v1481 = vadd.f32 0.0, %v1480
    %1482 = vmatmul.f32.gmra.mxu0 %v231
    %v1483 = vpop.f32.mrf.mxu0
    %v1484 = vadd.f32 0.0, %v1483
    %1485 = vmatmul.f32.gmra.mxu0 %v234
    %v1486 = vpop.f32.mrf.mxu0
    %v1487 = vadd.f32 0.0, %v1486
    %1488 = vmatmul.f32.gmra.mxu0 %v237
    %v1489 = vpop.f32.mrf.mxu0
    %v1490 = vadd.f32 0.0, %v1489
    %1491 = vmatmul.f32.gmra.mxu0 %v240
    %v1492 = vpop.f32.mrf.mxu0
    %v1493 = vadd.f32 0.0, %v1492
    %1494 = vmatmul.f32.gmra.mxu0 %v243
    %v1495 = vpop.f32.mrf.mxu0
    %v1496 = vadd.f32 0.0, %v1495
    %1497 = vmatmul.f32.gmra.mxu0 %v246
    %v1498 = vpop.f32.mrf.mxu0
    %v1499 = vadd.f32 0.0, %v1498
    %1500 = vmatmul.f32.gmra.mxu0 %v249
    %v1501 = vpop.f32.mrf.mxu0
    %v1502 = vadd.f32 0.0, %v1501
    %1503 = vmatmul.f32.gmra.mxu0 %v252
    %v1504 = vpop.f32.mrf.mxu0
    %v1505 = vadd.f32 0.0, %v1504
    %1506 = vmatmul.f32.gmra.mxu0 %v255
    %v1507 = vpop.f32.mrf.mxu0
    %v1508 = vadd.f32 0.0, %v1507
    %1509 = vmatmul.f32.gmra.mxu0 %v258
    %v1510 = vpop.f32.mrf.mxu0
    %v1511 = vadd.f32 0.0, %v1510
    %1512 = vmatmul.f32.gmra.mxu0 %v261
    %v1513 = vpop.f32.mrf.mxu0
    %v1514 = vadd.f32 0.0, %v1513
    %1515 = vmatmul.f32.gmra.mxu0 %v264
    %v1516 = vpop.f32.mrf.mxu0
    %v1517 = vadd.f32 0.0, %v1516
    %1518 = vmatmul.f32.gmra.mxu0 %v267
    %v1519 = vpop.f32.mrf.mxu0
    %v1520 = vadd.f32 0.0, %v1519
    %1521 = vmatmul.f32.gmra.mxu0 %v270
    %v1522 = vpop.f32.mrf.mxu0
    %v1523 = vadd.f32 0.0, %v1522
    %1524 = vmatmul.f32.gmra.mxu0 %v273
    %v1525 = vpop.f32.mrf.mxu0
    %v1526 = vadd.f32 0.0, %v1525
    %1527 = vmatmul.f32.gmra.mxu0 %v276
    %v1528 = vpop.f32.mrf.mxu0
    %v1529 = vadd.f32 0.0, %v1528
    %1530 = vmatmul.f32.gmra.mxu0 %v279
    %v1531 = vpop.f32.mrf.mxu0
    %v1532 = vadd.f32 0.0, %v1531
    %1533 = vmatmul.f32.gmra.mxu0 %v282
    %v1534 = vpop.f32.mrf.mxu0
    %v1535 = vadd.f32 0.0, %v1534
    %1536 = vmatmul.f32.gmra.mxu0 %v285
    %v1537 = vpop.f32.mrf.mxu0
    %v1538 = vadd.f32 0.0, %v1537
    %1539 = vmatmul.f32.gmra.mxu0 %v288
    %v1540 = vpop.f32.mrf.mxu0
    %v1541 = vadd.f32 0.0, %v1540
    %1542 = vmatmul.f32.gmra.mxu0 %v291
    %v1543 = vpop.f32.mrf.mxu0
    %v1544 = vadd.f32 0.0, %v1543
    %1545 = vmatmul.f32.gmra.mxu0 %v294
    %v1546 = vpop.f32.mrf.mxu0
    %v1547 = vadd.f32 0.0, %v1546
    %1548 = vmatmul.f32.gmra.mxu0 %v297
    %v1549 = vpop.f32.mrf.mxu0
    %v1550 = vadd.f32 0.0, %v1549
    %1551 = vmatmul.f32.gmra.mxu0 %v300
    %v1552 = vpop.f32.mrf.mxu0
    %v1553 = vadd.f32 0.0, %v1552
    %1554 = vmatmul.f32.gmra.mxu0 %v303
    %v1555 = vpop.f32.mrf.mxu0
    %v1556 = vadd.f32 0.0, %v1555
    %1557 = vmatmul.f32.gmra.mxu0 %v306
    %v1558 = vpop.f32.mrf.mxu0
    %v1559 = vadd.f32 0.0, %v1558
    %1560 = vdwg.mxu0
    %1561 = vst [vmem:[#allocation5] sm:$0xff] %v326
    %1562 = vst [vmem:[#allocation5 + $0x8] sm:$0xff] %v505
    %1563 = vst [vmem:[#allocation5 + $0x10] sm:$0xff] %v684
    %1564 = vst [vmem:[#allocation5 + $0x18] sm:$0xff] %v863
    %1565 = vst [vmem:[#allocation5 + $0x20] sm:$0xff] %v1042
    %1566 = vst [vmem:[#allocation5 + $0x28] sm:$0xff] %v1221
    %vm1567 = vcmask 130048
    %1568 = vst.msk [vmem:[#allocation5 + $0x30] sm:$0xff] %vm1567, %v1400
    %1569 = vst [vmem:[#allocation5 + $0x38] sm:$0xff] %v329
    %1570 = vst [vmem:[#allocation5 + $0x40] sm:$0xff] %v508
    %1571 = vst [vmem:[#allocation5 + $0x48] sm:$0xff] %v687
    %1572 = vst [vmem:[#allocation5 + $0x50] sm:$0xff] %v866
    %1573 = vst [vmem:[#allocation5 + $0x58] sm:$0xff] %v1045
    %1574 = vst [vmem:[#allocation5 + $0x60] sm:$0xff] %v1224
    %1575 = vst.msk [vmem:[#allocation5 + $0x68] sm:$0xff] %vm1567, %v1403
    %1576 = vst [vmem:[#allocation5 + $0x70] sm:$0xff] %v332
    %1577 = vst [vmem:[#allocation5 + $0x78] sm:$0xff] %v511
    %1578 = vst [vmem:[#allocation5 + $0x80] sm:$0xff] %v690
    %1579 = vst [vmem:[#allocation5 + $0x88] sm:$0xff] %v869
    %1580 = vst [vmem:[#allocation5 + $0x90] sm:$0xff] %v1048
    %1581 = vst [vmem:[#allocation5 + $0x98] sm:$0xff] %v1227
    %1582 = vst.msk [vmem:[#allocation5 + $0xa0] sm:$0xff] %vm1567, %v1406
    %1583 = vst [vmem:[#allocation5 + $0xa8] sm:$0xff] %v335
    %1584 = vst [vmem:[#allocation5 + $0xb0] sm:$0xff] %v514
    %1585 = vst [vmem:[#allocation5 + $0xb8] sm:$0xff] %v693
    %1586 = vst [vmem:[#allocation5 + $0xc0] sm:$0xff] %v872
    %1587 = vst [vmem:[#allocation5 + $0xc8] sm:$0xff] %v1051
    %1588 = vst [vmem:[#allocation5 + $0xd0] sm:$0xff] %v1230
    %1589 = vst.msk [vmem:[#allocation5 + $0xd8] sm:$0xff] %vm1567, %v1409
    %1590 = vst [vmem:[#allocation5 + $0xe0] sm:$0xff] %v338
    %1591 = vst [vmem:[#allocation5 + $0xe8] sm:$0xff] %v517
    %1592 = vst [vmem:[#allocation5 + $0xf0] sm:$0xff] %v696
    %1593 = vst [vmem:[#allocation5 + $0xf8] sm:$0xff] %v875
    %1594 = vst [vmem:[#allocation5 + $0x100] sm:$0xff] %v1054
    %1595 = vst [vmem:[#allocation5 + $0x108] sm:$0xff] %v1233
    %1596 = vst.msk [vmem:[#allocation5 + $0x110] sm:$0xff] %vm1567, %v1412
    %1597 = vst [vmem:[#allocation5 + $0x118] sm:$0xff] %v341
    %1598 = vst [vmem:[#allocation5 + $0x120] sm:$0xff] %v520
    %1599 = vst [vmem:[#allocation5 + $0x128] sm:$0xff] %v699
    %1600 = vst [vmem:[#allocation5 + $0x130] sm:$0xff] %v878
    %1601 = vst [vmem:[#allocation5 + $0x138] sm:$0xff] %v1057
    %1602 = vst [vmem:[#allocation5 + $0x140] sm:$0xff] %v1236
    %1603 = vst.msk [vmem:[#allocation5 + $0x148] sm:$0xff] %vm1567, %v1415
    %1604 = vst [vmem:[#allocation5 + $0x150] sm:$0xff] %v344
    %1605 = vst [vmem:[#allocation5 + $0x158] sm:$0xff] %v523
    %1606 = vst [vmem:[#allocation5 + $0x160] sm:$0xff] %v702
    %1607 = vst [vmem:[#allocation5 + $0x168] sm:$0xff] %v881
    %1608 = vst [vmem:[#allocation5 + $0x170] sm:$0xff] %v1060
    %1609 = vst [vmem:[#allocation5 + $0x178] sm:$0xff] %v1239
    %1610 = vst.msk [vmem:[#allocation5 + $0x180] sm:$0xff] %vm1567, %v1418
    %1611 = vst [vmem:[#allocation5 + $0x188] sm:$0xff] %v347
    %1612 = vst [vmem:[#allocation5 + $0x190] sm:$0xff] %v526
    %1613 = vst [vmem:[#allocation5 + $0x198] sm:$0xff] %v705
    %1614 = vst [vmem:[#allocation5 + $0x1a0] sm:$0xff] %v884
    %1615 = vst [vmem:[#allocation5 + $0x1a8] sm:$0xff] %v1063
    %1616 = vst [vmem:[#allocation5 + $0x1b0] sm:$0xff] %v1242
    %1617 = vst.msk [vmem:[#allocation5 + $0x1b8] sm:$0xff] %vm1567, %v1421
    %1618 = vst [vmem:[#allocation5 + $0x1c0] sm:$0xff] %v350
    %1619 = vst [vmem:[#allocation5 + $0x1c8] sm:$0xff] %v529
    %1620 = vst [vmem:[#allocation5 + $0x1d0] sm:$0xff] %v708
    %1621 = vst [vmem:[#allocation5 + $0x1d8] sm:$0xff] %v887
    %1622 = vst [vmem:[#allocation5 + $0x1e0] sm:$0xff] %v1066
    %1623 = vst [vmem:[#allocation5 + $0x1e8] sm:$0xff] %v1245
    %1624 = vst.msk [vmem:[#allocation5 + $0x1f0] sm:$0xff] %vm1567, %v1424
    %1625 = vst [vmem:[#allocation5 + $0x1f8] sm:$0xff] %v353
    %1626 = vst [vmem:[#allocation5 + $0x200] sm:$0xff] %v532
    %1627 = vst [vmem:[#allocation5 + $0x208] sm:$0xff] %v711
    %1628 = vst [vmem:[#allocation5 + $0x210] sm:$0xff] %v890
    %1629 = vst [vmem:[#allocation5 + $0x218] sm:$0xff] %v1069
    %1630 = vst [vmem:[#allocation5 + $0x220] sm:$0xff] %v1248
    %1631 = vst.msk [vmem:[#allocation5 + $0x228] sm:$0xff] %vm1567, %v1427
    %1632 = vst [vmem:[#allocation5 + $0x230] sm:$0xff] %v356
    %1633 = vst [vmem:[#allocation5 + $0x238] sm:$0xff] %v535
    %1634 = vst [vmem:[#allocation5 + $0x240] sm:$0xff] %v714
    %1635 = vst [vmem:[#allocation5 + $0x248] sm:$0xff] %v893
    %1636 = vst [vmem:[#allocation5 + $0x250] sm:$0xff] %v1072
    %1637 = vst [vmem:[#allocation5 + $0x258] sm:$0xff] %v1251
    %1638 = vst.msk [vmem:[#allocation5 + $0x260] sm:$0xff] %vm1567, %v1430
    %1639 = vst [vmem:[#allocation5 + $0x268] sm:$0xff] %v359
    %1640 = vst [vmem:[#allocation5 + $0x270] sm:$0xff] %v538
    %1641 = vst [vmem:[#allocation5 + $0x278] sm:$0xff] %v717
    %1642 = vst [vmem:[#allocation5 + $0x280] sm:$0xff] %v896
    %1643 = vst [vmem:[#allocation5 + $0x288] sm:$0xff] %v1075
    %1644 = vst [vmem:[#allocation5 + $0x290] sm:$0xff] %v1254
    %1645 = vst.msk [vmem:[#allocation5 + $0x298] sm:$0xff] %vm1567, %v1433
    %1646 = vst [vmem:[#allocation5 + $0x2a0] sm:$0xff] %v362
    %1647 = vst [vmem:[#allocation5 + $0x2a8] sm:$0xff] %v541
    %1648 = vst [vmem:[#allocation5 + $0x2b0] sm:$0xff] %v720
    %1649 = vst [vmem:[#allocation5 + $0x2b8] sm:$0xff] %v899
    %1650 = vst [vmem:[#allocation5 + $0x2c0] sm:$0xff] %v1078
    %1651 = vst [vmem:[#allocation5 + $0x2c8] sm:$0xff] %v1257
    %1652 = vst.msk [vmem:[#allocation5 + $0x2d0] sm:$0xff] %vm1567, %v1436
    %1653 = vst [vmem:[#allocation5 + $0x2d8] sm:$0xff] %v365
    %1654 = vst [vmem:[#allocation5 + $0x2e0] sm:$0xff] %v544
    %1655 = vst [vmem:[#allocation5 + $0x2e8] sm:$0xff] %v723
    %1656 = vst [vmem:[#allocation5 + $0x2f0] sm:$0xff] %v902
    %1657 = vst [vmem:[#allocation5 + $0x2f8] sm:$0xff] %v1081
    %1658 = vst [vmem:[#allocation5 + $0x300] sm:$0xff] %v1260
    %1659 = vst.msk [vmem:[#allocation5 + $0x308] sm:$0xff] %vm1567, %v1439
    %1660 = vst [vmem:[#allocation5 + $0x310] sm:$0xff] %v368
    %1661 = vst [vmem:[#allocation5 + $0x318] sm:$0xff] %v547
    %1662 = vst [vmem:[#allocation5 + $0x320] sm:$0xff] %v726
    %1663 = vst [vmem:[#allocation5 + $0x328] sm:$0xff] %v905
    %1664 = vst [vmem:[#allocation5 + $0x330] sm:$0xff] %v1084
    %1665 = vst [vmem:[#allocation5 + $0x338] sm:$0xff] %v1263
    %1666 = vst.msk [vmem:[#allocation5 + $0x340] sm:$0xff] %vm1567, %v1442
    %1667 = vst [vmem:[#allocation5 + $0x348] sm:$0xff] %v371
    %1668 = vst [vmem:[#allocation5 + $0x350] sm:$0xff] %v550
    %1669 = vst [vmem:[#allocation5 + $0x358] sm:$0xff] %v729
    %1670 = vst [vmem:[#allocation5 + $0x360] sm:$0xff] %v908
    %1671 = vst [vmem:[#allocation5 + $0x368] sm:$0xff] %v1087
    %1672 = vst [vmem:[#allocation5 + $0x370] sm:$0xff] %v1266
    %1673 = vst.msk [vmem:[#allocation5 + $0x378] sm:$0xff] %vm1567, %v1445
    %1674 = vst [vmem:[#allocation5 + $0x380] sm:$0xff] %v374
    %1675 = vst [vmem:[#allocation5 + $0x388] sm:$0xff] %v553
    %1676 = vst [vmem:[#allocation5 + $0x390] sm:$0xff] %v732
    %1677 = vst [vmem:[#allocation5 + $0x398] sm:$0xff] %v911
    %1678 = vst [vmem:[#allocation5 + $0x3a0] sm:$0xff] %v1090
    %1679 = vst [vmem:[#allocation5 + $0x3a8] sm:$0xff] %v1269
    %1680 = vst.msk [vmem:[#allocation5 + $0x3b0] sm:$0xff] %vm1567, %v1448
    %1681 = vst [vmem:[#allocation5 + $0x3b8] sm:$0xff] %v377
    %1682 = vst [vmem:[#allocation5 + $0x3c0] sm:$0xff] %v556
    %1683 = vst [vmem:[#allocation5 + $0x3c8] sm:$0xff] %v735
    %1684 = vst [vmem:[#allocation5 + $0x3d0] sm:$0xff] %v914
    %1685 = vst [vmem:[#allocation5 + $0x3d8] sm:$0xff] %v1093
    %1686 = vst [vmem:[#allocation5 + $0x3e0] sm:$0xff] %v1272
    %1687 = vst.msk [vmem:[#allocation5 + $0x3e8] sm:$0xff] %vm1567, %v1451
    %1688 = vst [vmem:[#allocation5 + $0x3f0] sm:$0xff] %v380
    %1689 = vst [vmem:[#allocation5 + $0x3f8] sm:$0xff] %v559
    %1690 = vst [vmem:[#allocation5 + $0x400] sm:$0xff] %v738
    %1691 = vst [vmem:[#allocation5 + $0x408] sm:$0xff] %v917
    %1692 = vst [vmem:[#allocation5 + $0x410] sm:$0xff] %v1096
    %1693 = vst [vmem:[#allocation5 + $0x418] sm:$0xff] %v1275
    %1694 = vst.msk [vmem:[#allocation5 + $0x420] sm:$0xff] %vm1567, %v1454
    %1695 = vst [vmem:[#allocation5 + $0x428] sm:$0xff] %v383
    %1696 = vst [vmem:[#allocation5 + $0x430] sm:$0xff] %v562
    %1697 = vst [vmem:[#allocation5 + $0x438] sm:$0xff] %v741
    %1698 = vst [vmem:[#allocation5 + $0x440] sm:$0xff] %v920
    %1699 = vst [vmem:[#allocation5 + $0x448] sm:$0xff] %v1099
    %1700 = vst [vmem:[#allocation5 + $0x450] sm:$0xff] %v1278
    %1701 = vst.msk [vmem:[#allocation5 + $0x458] sm:$0xff] %vm1567, %v1457
    %1702 = vst [vmem:[#allocation5 + $0x460] sm:$0xff] %v386
    %1703 = vst [vmem:[#allocation5 + $0x468] sm:$0xff] %v565
    %1704 = vst [vmem:[#allocation5 + $0x470] sm:$0xff] %v744
    %1705 = vst [vmem:[#allocation5 + $0x478] sm:$0xff] %v923
    %1706 = vst [vmem:[#allocation5 + $0x480] sm:$0xff] %v1102
    %1707 = vst [vmem:[#allocation5 + $0x488] sm:$0xff] %v1281
    %1708 = vst.msk [vmem:[#allocation5 + $0x490] sm:$0xff] %vm1567, %v1460
    %1709 = vst [vmem:[#allocation5 + $0x498] sm:$0xff] %v389
    %1710 = vst [vmem:[#allocation5 + $0x4a0] sm:$0xff] %v568
    %1711 = vst [vmem:[#allocation5 + $0x4a8] sm:$0xff] %v747
    %1712 = vst [vmem:[#allocation5 + $0x4b0] sm:$0xff] %v926
    %1713 = vst [vmem:[#allocation5 + $0x4b8] sm:$0xff] %v1105
    %1714 = vst [vmem:[#allocation5 + $0x4c0] sm:$0xff] %v1284
    %1715 = vst.msk [vmem:[#allocation5 + $0x4c8] sm:$0xff] %vm1567, %v1463
    %1716 = vst [vmem:[#allocation5 + $0x4d0] sm:$0xff] %v392
    %1717 = vst [vmem:[#allocation5 + $0x4d8] sm:$0xff] %v571
    %1718 = vst [vmem:[#allocation5 + $0x4e0] sm:$0xff] %v750
    %1719 = vst [vmem:[#allocation5 + $0x4e8] sm:$0xff] %v929
    %1720 = vst [vmem:[#allocation5 + $0x4f0] sm:$0xff] %v1108
    %1721 = vst [vmem:[#allocation5 + $0x4f8] sm:$0xff] %v1287
    %1722 = vst.msk [vmem:[#allocation5 + $0x500] sm:$0xff] %vm1567, %v1466
    %1723 = vst [vmem:[#allocation5 + $0x508] sm:$0xff] %v395
    %1724 = vst [vmem:[#allocation5 + $0x510] sm:$0xff] %v574
    %1725 = vst [vmem:[#allocation5 + $0x518] sm:$0xff] %v753
    %1726 = vst [vmem:[#allocation5 + $0x520] sm:$0xff] %v932
    %1727 = vst [vmem:[#allocation5 + $0x528] sm:$0xff] %v1111
    %1728 = vst [vmem:[#allocation5 + $0x530] sm:$0xff] %v1290
    %1729 = vst.msk [vmem:[#allocation5 + $0x538] sm:$0xff] %vm1567, %v1469
    %1730 = vst [vmem:[#allocation5 + $0x540] sm:$0xff] %v398
    %1731 = vst [vmem:[#allocation5 + $0x548] sm:$0xff] %v577
    %1732 = vst [vmem:[#allocation5 + $0x550] sm:$0xff] %v756
    %1733 = vst [vmem:[#allocation5 + $0x558] sm:$0xff] %v935
    %1734 = vst [vmem:[#allocation5 + $0x560] sm:$0xff] %v1114
    %1735 = vst [vmem:[#allocation5 + $0x568] sm:$0xff] %v1293
    %1736 = vst.msk [vmem:[#allocation5 + $0x570] sm:$0xff] %vm1567, %v1472
    %1737 = vst [vmem:[#allocation5 + $0x578] sm:$0xff] %v401
    %1738 = vst [vmem:[#allocation5 + $0x580] sm:$0xff] %v580
    %1739 = vst [vmem:[#allocation5 + $0x588] sm:$0xff] %v759
    %1740 = vst [vmem:[#allocation5 + $0x590] sm:$0xff] %v938
    %1741 = vst [vmem:[#allocation5 + $0x598] sm:$0xff] %v1117
    %1742 = vst [vmem:[#allocation5 + $0x5a0] sm:$0xff] %v1296
    %1743 = vst.msk [vmem:[#allocation5 + $0x5a8] sm:$0xff] %vm1567, %v1475
    %1744 = vst [vmem:[#allocation5 + $0x5b0] sm:$0xff] %v404
    %1745 = vst [vmem:[#allocation5 + $0x5b8] sm:$0xff] %v583
    %1746 = vst [vmem:[#allocation5 + $0x5c0] sm:$0xff] %v762
    %1747 = vst [vmem:[#allocation5 + $0x5c8] sm:$0xff] %v941
    %1748 = vst [vmem:[#allocation5 + $0x5d0] sm:$0xff] %v1120
    %1749 = vst [vmem:[#allocation5 + $0x5d8] sm:$0xff] %v1299
    %1750 = vst.msk [vmem:[#allocation5 + $0x5e0] sm:$0xff] %vm1567, %v1478
    %1751 = vst [vmem:[#allocation5 + $0x5e8] sm:$0xff] %v407
    %1752 = vst [vmem:[#allocation5 + $0x5f0] sm:$0xff] %v586
    %1753 = vst [vmem:[#allocation5 + $0x5f8] sm:$0xff] %v765
    %1754 = vst [vmem:[#allocation5 + $0x600] sm:$0xff] %v944
    %1755 = vst [vmem:[#allocation5 + $0x608] sm:$0xff] %v1123
    %1756 = vst [vmem:[#allocation5 + $0x610] sm:$0xff] %v1302
    %1757 = vst.msk [vmem:[#allocation5 + $0x618] sm:$0xff] %vm1567, %v1481
    %1758 = vst [vmem:[#allocation5 + $0x620] sm:$0xff] %v410
    %1759 = vst [vmem:[#allocation5 + $0x628] sm:$0xff] %v589
    %1760 = vst [vmem:[#allocation5 + $0x630] sm:$0xff] %v768
    %1761 = vst [vmem:[#allocation5 + $0x638] sm:$0xff] %v947
    %1762 = vst [vmem:[#allocation5 + $0x640] sm:$0xff] %v1126
    %1763 = vst [vmem:[#allocation5 + $0x648] sm:$0xff] %v1305
    %1764 = vst.msk [vmem:[#allocation5 + $0x650] sm:$0xff] %vm1567, %v1484
    %1765 = vst [vmem:[#allocation5 + $0x658] sm:$0xff] %v413
    %1766 = vst [vmem:[#allocation5 + $0x660] sm:$0xff] %v592
    %1767 = vst [vmem:[#allocation5 + $0x668] sm:$0xff] %v771
    %1768 = vst [vmem:[#allocation5 + $0x670] sm:$0xff] %v950
    %1769 = vst [vmem:[#allocation5 + $0x678] sm:$0xff] %v1129
    %1770 = vst [vmem:[#allocation5 + $0x680] sm:$0xff] %v1308
    %1771 = vst.msk [vmem:[#allocation5 + $0x688] sm:$0xff] %vm1567, %v1487
    %1772 = vst [vmem:[#allocation5 + $0x690] sm:$0xff] %v416
    %1773 = vst [vmem:[#allocation5 + $0x698] sm:$0xff] %v595
    %1774 = vst [vmem:[#allocation5 + $0x6a0] sm:$0xff] %v774
    %1775 = vst [vmem:[#allocation5 + $0x6a8] sm:$0xff] %v953
    %1776 = vst [vmem:[#allocation5 + $0x6b0] sm:$0xff] %v1132
    %1777 = vst [vmem:[#allocation5 + $0x6b8] sm:$0xff] %v1311
    %1778 = vst.msk [vmem:[#allocation5 + $0x6c0] sm:$0xff] %vm1567, %v1490
    %1779 = vst [vmem:[#allocation5 + $0x6c8] sm:$0xff] %v419
    %1780 = vst [vmem:[#allocation5 + $0x6d0] sm:$0xff] %v598
    %1781 = vst [vmem:[#allocation5 + $0x6d8] sm:$0xff] %v777
    %1782 = vst [vmem:[#allocation5 + $0x6e0] sm:$0xff] %v956
    %1783 = vst [vmem:[#allocation5 + $0x6e8] sm:$0xff] %v1135
    %1784 = vst [vmem:[#allocation5 + $0x6f0] sm:$0xff] %v1314
    %1785 = vst.msk [vmem:[#allocation5 + $0x6f8] sm:$0xff] %vm1567, %v1493
    %1786 = vst [vmem:[#allocation5 + $0x700] sm:$0xff] %v422
    %1787 = vst [vmem:[#allocation5 + $0x708] sm:$0xff] %v601
    %1788 = vst [vmem:[#allocation5 + $0x710] sm:$0xff] %v780
    %1789 = vst [vmem:[#allocation5 + $0x718] sm:$0xff] %v959
    %1790 = vst [vmem:[#allocation5 + $0x720] sm:$0xff] %v1138
    %1791 = vst [vmem:[#allocation5 + $0x728] sm:$0xff] %v1317
    %1792 = vst.msk [vmem:[#allocation5 + $0x730] sm:$0xff] %vm1567, %v1496
    %1793 = vst [vmem:[#allocation5 + $0x738] sm:$0xff] %v425
    %1794 = vst [vmem:[#allocation5 + $0x740] sm:$0xff] %v604
    %1795 = vst [vmem:[#allocation5 + $0x748] sm:$0xff] %v783
    %1796 = vst [vmem:[#allocation5 + $0x750] sm:$0xff] %v962
    %1797 = vst [vmem:[#allocation5 + $0x758] sm:$0xff] %v1141
    %1798 = vst [vmem:[#allocation5 + $0x760] sm:$0xff] %v1320
    %1799 = vst.msk [vmem:[#allocation5 + $0x768] sm:$0xff] %vm1567, %v1499
    %1800 = vst [vmem:[#allocation5 + $0x770] sm:$0xff] %v428
    %1801 = vst [vmem:[#allocation5 + $0x778] sm:$0xff] %v607
    %1802 = vst [vmem:[#allocation5 + $0x780] sm:$0xff] %v786
    %1803 = vst [vmem:[#allocation5 + $0x788] sm:$0xff] %v965
    %1804 = vst [vmem:[#allocation5 + $0x790] sm:$0xff] %v1144
    %1805 = vst [vmem:[#allocation5 + $0x798] sm:$0xff] %v1323
    %1806 = vst.msk [vmem:[#allocation5 + $0x7a0] sm:$0xff] %vm1567, %v1502
    %1807 = vst [vmem:[#allocation5 + $0x7a8] sm:$0xff] %v431
    %1808 = vst [vmem:[#allocation5 + $0x7b0] sm:$0xff] %v610
    %1809 = vst [vmem:[#allocation5 + $0x7b8] sm:$0xff] %v789
    %1810 = vst [vmem:[#allocation5 + $0x7c0] sm:$0xff] %v968
    %1811 = vst [vmem:[#allocation5 + $0x7c8] sm:$0xff] %v1147
    %1812 = vst [vmem:[#allocation5 + $0x7d0] sm:$0xff] %v1326
    %1813 = vst.msk [vmem:[#allocation5 + $0x7d8] sm:$0xff] %vm1567, %v1505
    %1814 = vst [vmem:[#allocation5 + $0x7e0] sm:$0xff] %v434
    %1815 = vst [vmem:[#allocation5 + $0x7e8] sm:$0xff] %v613
    %1816 = vst [vmem:[#allocation5 + $0x7f0] sm:$0xff] %v792
    %1817 = vst [vmem:[#allocation5 + $0x7f8] sm:$0xff] %v971
    %1818 = vst [vmem:[#allocation5 + $0x800] sm:$0xff] %v1150
    %1819 = vst [vmem:[#allocation5 + $0x808] sm:$0xff] %v1329
    %1820 = vst.msk [vmem:[#allocation5 + $0x810] sm:$0xff] %vm1567, %v1508
    %1821 = vst [vmem:[#allocation5 + $0x818] sm:$0xff] %v437
    %1822 = vst [vmem:[#allocation5 + $0x820] sm:$0xff] %v616
    %1823 = vst [vmem:[#allocation5 + $0x828] sm:$0xff] %v795
    %1824 = vst [vmem:[#allocation5 + $0x830] sm:$0xff] %v974
    %1825 = vst [vmem:[#allocation5 + $0x838] sm:$0xff] %v1153
    %1826 = vst [vmem:[#allocation5 + $0x840] sm:$0xff] %v1332
    %1827 = vst.msk [vmem:[#allocation5 + $0x848] sm:$0xff] %vm1567, %v1511
    %1828 = vst [vmem:[#allocation5 + $0x850] sm:$0xff] %v440
    %1829 = vst [vmem:[#allocation5 + $0x858] sm:$0xff] %v619
    %1830 = vst [vmem:[#allocation5 + $0x860] sm:$0xff] %v798
    %1831 = vst [vmem:[#allocation5 + $0x868] sm:$0xff] %v977
    %1832 = vst [vmem:[#allocation5 + $0x870] sm:$0xff] %v1156
    %1833 = vst [vmem:[#allocation5 + $0x878] sm:$0xff] %v1335
    %1834 = vst.msk [vmem:[#allocation5 + $0x880] sm:$0xff] %vm1567, %v1514
    %1835 = vst [vmem:[#allocation5 + $0x888] sm:$0xff] %v443
    %1836 = vst [vmem:[#allocation5 + $0x890] sm:$0xff] %v622
    %1837 = vst [vmem:[#allocation5 + $0x898] sm:$0xff] %v801
    %1838 = vst [vmem:[#allocation5 + $0x8a0] sm:$0xff] %v980
    %1839 = vst [vmem:[#allocation5 + $0x8a8] sm:$0xff] %v1159
    %1840 = vst [vmem:[#allocation5 + $0x8b0] sm:$0xff] %v1338
    %1841 = vst.msk [vmem:[#allocation5 + $0x8b8] sm:$0xff] %vm1567, %v1517
    %1842 = vst [vmem:[#allocation5 + $0x8c0] sm:$0xff] %v446
    %1843 = vst [vmem:[#allocation5 + $0x8c8] sm:$0xff] %v625
    %1844 = vst [vmem:[#allocation5 + $0x8d0] sm:$0xff] %v804
    %1845 = vst [vmem:[#allocation5 + $0x8d8] sm:$0xff] %v983
    %1846 = vst [vmem:[#allocation5 + $0x8e0] sm:$0xff] %v1162
    %1847 = vst [vmem:[#allocation5 + $0x8e8] sm:$0xff] %v1341
    %1848 = vst.msk [vmem:[#allocation5 + $0x8f0] sm:$0xff] %vm1567, %v1520
    %1849 = vst [vmem:[#allocation5 + $0x8f8] sm:$0xff] %v449
    %1850 = vst [vmem:[#allocation5 + $0x900] sm:$0xff] %v628
    %1851 = vst [vmem:[#allocation5 + $0x908] sm:$0xff] %v807
    %1852 = vst [vmem:[#allocation5 + $0x910] sm:$0xff] %v986
    %1853 = vst [vmem:[#allocation5 + $0x918] sm:$0xff] %v1165
    %1854 = vst [vmem:[#allocation5 + $0x920] sm:$0xff] %v1344
    %1855 = vst.msk [vmem:[#allocation5 + $0x928] sm:$0xff] %vm1567, %v1523
    %1856 = vst [vmem:[#allocation5 + $0x930] sm:$0xff] %v452
    %1857 = vst [vmem:[#allocation5 + $0x938] sm:$0xff] %v631
    %1858 = vst [vmem:[#allocation5 + $0x940] sm:$0xff] %v810
    %1859 = vst [vmem:[#allocation5 + $0x948] sm:$0xff] %v989
    %1860 = vst [vmem:[#allocation5 + $0x950] sm:$0xff] %v1168
    %1861 = vst [vmem:[#allocation5 + $0x958] sm:$0xff] %v1347
    %1862 = vst.msk [vmem:[#allocation5 + $0x960] sm:$0xff] %vm1567, %v1526
    %1863 = vst [vmem:[#allocation5 + $0x968] sm:$0xff] %v455
    %1864 = vst [vmem:[#allocation5 + $0x970] sm:$0xff] %v634
    %1865 = vst [vmem:[#allocation5 + $0x978] sm:$0xff] %v813
    %1866 = vst [vmem:[#allocation5 + $0x980] sm:$0xff] %v992
    %1867 = vst [vmem:[#allocation5 + $0x988] sm:$0xff] %v1171
    %1868 = vst [vmem:[#allocation5 + $0x990] sm:$0xff] %v1350
    %1869 = vst.msk [vmem:[#allocation5 + $0x998] sm:$0xff] %vm1567, %v1529
    %1870 = vst [vmem:[#allocation5 + $0x9a0] sm:$0xff] %v458
    %1871 = vst [vmem:[#allocation5 + $0x9a8] sm:$0xff] %v637
    %1872 = vst [vmem:[#allocation5 + $0x9b0] sm:$0xff] %v816
    %1873 = vst [vmem:[#allocation5 + $0x9b8] sm:$0xff] %v995
    %1874 = vst [vmem:[#allocation5 + $0x9c0] sm:$0xff] %v1174
    %1875 = vst [vmem:[#allocation5 + $0x9c8] sm:$0xff] %v1353
    %1876 = vst.msk [vmem:[#allocation5 + $0x9d0] sm:$0xff] %vm1567, %v1532
    %1877 = vst [vmem:[#allocation5 + $0x9d8] sm:$0xff] %v461
    %1878 = vst [vmem:[#allocation5 + $0x9e0] sm:$0xff] %v640
    %1879 = vst [vmem:[#allocation5 + $0x9e8] sm:$0xff] %v819
    %1880 = vst [vmem:[#allocation5 + $0x9f0] sm:$0xff] %v998
    %1881 = vst [vmem:[#allocation5 + $0x9f8] sm:$0xff] %v1177
    %1882 = vst [vmem:[#allocation5 + $0xa00] sm:$0xff] %v1356
    %1883 = vst.msk [vmem:[#allocation5 + $0xa08] sm:$0xff] %vm1567, %v1535
    %1884 = vst [vmem:[#allocation5 + $0xa10] sm:$0xff] %v464
    %1885 = vst [vmem:[#allocation5 + $0xa18] sm:$0xff] %v643
    %1886 = vst [vmem:[#allocation5 + $0xa20] sm:$0xff] %v822
    %1887 = vst [vmem:[#allocation5 + $0xa28] sm:$0xff] %v1001
    %1888 = vst [vmem:[#allocation5 + $0xa30] sm:$0xff] %v1180
    %1889 = vst [vmem:[#allocation5 + $0xa38] sm:$0xff] %v1359
    %1890 = vst.msk [vmem:[#allocation5 + $0xa40] sm:$0xff] %vm1567, %v1538
    %1891 = vst [vmem:[#allocation5 + $0xa48] sm:$0xff] %v467
    %1892 = vst [vmem:[#allocation5 + $0xa50] sm:$0xff] %v646
    %1893 = vst [vmem:[#allocation5 + $0xa58] sm:$0xff] %v825
    %1894 = vst [vmem:[#allocation5 + $0xa60] sm:$0xff] %v1004
    %1895 = vst [vmem:[#allocation5 + $0xa68] sm:$0xff] %v1183
    %1896 = vst [vmem:[#allocation5 + $0xa70] sm:$0xff] %v1362
    %1897 = vst.msk [vmem:[#allocation5 + $0xa78] sm:$0xff] %vm1567, %v1541
    %1898 = vst [vmem:[#allocation5 + $0xa80] sm:$0xff] %v470
    %1899 = vst [vmem:[#allocation5 + $0xa88] sm:$0xff] %v649
    %1900 = vst [vmem:[#allocation5 + $0xa90] sm:$0xff] %v828
    %1901 = vst [vmem:[#allocation5 + $0xa98] sm:$0xff] %v1007
    %1902 = vst [vmem:[#allocation5 + $0xaa0] sm:$0xff] %v1186
    %1903 = vst [vmem:[#allocation5 + $0xaa8] sm:$0xff] %v1365
    %1904 = vst.msk [vmem:[#allocation5 + $0xab0] sm:$0xff] %vm1567, %v1544
    %1905 = vst [vmem:[#allocation5 + $0xab8] sm:$0xff] %v473
    %1906 = vst [vmem:[#allocation5 + $0xac0] sm:$0xff] %v652
    %1907 = vst [vmem:[#allocation5 + $0xac8] sm:$0xff] %v831
    %1908 = vst [vmem:[#allocation5 + $0xad0] sm:$0xff] %v1010
    %1909 = vst [vmem:[#allocation5 + $0xad8] sm:$0xff] %v1189
    %1910 = vst [vmem:[#allocation5 + $0xae0] sm:$0xff] %v1368
    %1911 = vst.msk [vmem:[#allocation5 + $0xae8] sm:$0xff] %vm1567, %v1547
    %1912 = vst [vmem:[#allocation5 + $0xaf0] sm:$0xff] %v476
    %1913 = vst [vmem:[#allocation5 + $0xaf8] sm:$0xff] %v655
    %1914 = vst [vmem:[#allocation5 + $0xb00] sm:$0xff] %v834
    %1915 = vst [vmem:[#allocation5 + $0xb08] sm:$0xff] %v1013
    %1916 = vst [vmem:[#allocation5 + $0xb10] sm:$0xff] %v1192
    %1917 = vst [vmem:[#allocation5 + $0xb18] sm:$0xff] %v1371
    %1918 = vst.msk [vmem:[#allocation5 + $0xb20] sm:$0xff] %vm1567, %v1550
    %1919 = vst [vmem:[#allocation5 + $0xb28] sm:$0xff] %v479
    %1920 = vst [vmem:[#allocation5 + $0xb30] sm:$0xff] %v658
    %1921 = vst [vmem:[#allocation5 + $0xb38] sm:$0xff] %v837
    %1922 = vst [vmem:[#allocation5 + $0xb40] sm:$0xff] %v1016
    %1923 = vst [vmem:[#allocation5 + $0xb48] sm:$0xff] %v1195
    %1924 = vst [vmem:[#allocation5 + $0xb50] sm:$0xff] %v1374
    %1925 = vst.msk [vmem:[#allocation5 + $0xb58] sm:$0xff] %vm1567, %v1553
    %1926 = vst [vmem:[#allocation5 + $0xb60] sm:$0xff] %v482
    %1927 = vst [vmem:[#allocation5 + $0xb68] sm:$0xff] %v661
    %1928 = vst [vmem:[#allocation5 + $0xb70] sm:$0xff] %v840
    %1929 = vst [vmem:[#allocation5 + $0xb78] sm:$0xff] %v1019
    %1930 = vst [vmem:[#allocation5 + $0xb80] sm:$0xff] %v1198
    %1931 = vst [vmem:[#allocation5 + $0xb88] sm:$0xff] %v1377
    %1932 = vst.msk [vmem:[#allocation5 + $0xb90] sm:$0xff] %vm1567, %v1556
    %1933 = vst [vmem:[#allocation5 + $0xb98] sm:$0xff] %v485
    %1934 = vst [vmem:[#allocation5 + $0xba0] sm:$0xff] %v664
    %1935 = vst [vmem:[#allocation5 + $0xba8] sm:$0xff] %v843
    %1936 = vst [vmem:[#allocation5 + $0xbb0] sm:$0xff] %v1022
    %1937 = vst [vmem:[#allocation5 + $0xbb8] sm:$0xff] %v1201
    %1938 = vst [vmem:[#allocation5 + $0xbc0] sm:$0xff] %v1380
    %1939 = vst.msk [vmem:[#allocation5 + $0xbc8] sm:$0xff] %vm1567, %v1559
    // Predicated region
    $region14: #{tpu_custom_call.1} parent=1 // pred_check
      _
    $region15: #{tpu_custom_call.1} parent=1 // pred_check_branch
      %1941 = sbr.rel (0) target = $region17
    $region16: #{tpu_custom_call.1} parent=1 // pred_region
      %1943 = vsyncadd [#allocation4], 0
      %s1944 = sshll.u32 [#allocation5], 4
      %s1945 = int_to_ptr.vmem [resolvable:$true] %s1944
      %s1946 = sshll.u32 %s2, 4
      %s1947 = int_to_ptr.hbm [resolvable:$true] %s1946
      %1952 = dma.vmem_to_hbm [thread:$0]  %s1945, 48384, %s1947, [#allocation4], 896, 896, 56
    $region17: #{tpu_custom_call.1} parent=1 // pred_fallthru
      _
    // Predicated region
    $region18: #{tpu_custom_call.1} parent=1 // pred_check
      _
    $region19: #{tpu_custom_call.1} parent=1 // pred_check_branch
      %1954 = sbr.rel (0) target = $region21
    $region20: #{tpu_custom_call.1} parent=1 // pred_region
      %1956 = dma.done [#allocation4], 48384
    $region21: #{tpu_custom_call.1} parent=1 // pred_fallthru
      _
    %1957 = vsyncpa [#allocation3], 1
    %1958 = vsyncpa [#allocation4], 1

</llo_original>
